<compile_context>
chip_gen: v7x
topology: tpu7x:2x2x1
jax: 0.10.0
libtpu: 0.0.40
codegen_flags: <defaults>
</compile_context>

<pallas_src>
import functools

import jax
import jax.numpy as jnp
from jax.experimental import pallas as pl
from jax.experimental.pallas import tpu as pltpu

N_CLASSES = 9
IN_FEATURES = 1024
N_PAD = 128  # pad the 9-wide logit axis to a full lane width


def _classifier_kernel(x_ref, w_ref, b_ref, o_ref, acc_ref, *, inv_hw):
    # x_ref  : (TB, TC, HW)  NCHW features, spatial dims flattened (lane = HW)
    # w_ref  : (TC, N_PAD)   fc weight tile (transposed & lane-padded)
    # b_ref  : (1,  N_PAD)   fc bias (lane-padded)
    # o_ref  : (TB, N_PAD)   logits (padded); written on the last C step only
    # acc_ref: (TB, N_PAD)   f32 accumulator, resident across the C grid axis
    k = pl.program_id(1)

    @pl.when(k == 0)
    def _():
        acc_ref[...] = jnp.zeros_like(acc_ref)

    # Spatial SUM (lane reduce) for this channel tile, then this tile's
    # partial matmul contribution.  Sum-then-scale: exactly one 1/HW multiply
    # on the tiny accumulator at the end, not per feature element.
    pooled = jnp.sum(x_ref[...], axis=-1)                       # (TB, TC)
    acc_ref[...] += jnp.dot(pooled, w_ref[...],
                            preferred_element_type=jnp.float32)  # MXU

    @pl.when(k == pl.num_programs(1) - 1)
    def _():
        o_ref[...] = acc_ref[...] * inv_hw + b_ref[...]


def _pick_channel_tile(b_tile, c, hw, budget_bytes):
    # Largest channel tile (multiple of 8, divides C) whose double-buffered
    # f32 feature block stays under the VMEM budget.
    for tc in (1024, 512, 256, 128, 64, 32, 16, 8):
        if c % tc == 0 and 2 * b_tile * tc * hw * 4 <= budget_bytes:
            return tc
    return c  # tiny C: single full block


def darknet_classifier_forward(x_nchw, fc_weight, fc_bias):
    """DarknetClassifier forward: (identity backbone) + avgpool(1,1) + Linear.

    x_nchw    : (B, C, H, W) float32   (PyTorch NCHW convention)
    fc_weight : (N_CLASSES, C) float32 (PyTorch nn.Linear weight layout)
    fc_bias   : (N_CLASSES,) float32
    returns   : (B, N_CLASSES) float32
    """
    # TODO(synk): DarkNet53 backbone source not provided; identity pass-through.
    feats = x_nchw
    b, c, h, w = feats.shape
    hw = h * w
    n = fc_weight.shape[0]

    # Metadata-only reshape of contiguous NCHW: no HBM round-trip.
    x_bchw = feats.reshape(b, c, hw)

    # Pad N: 9 -> 128 lanes (unmasked stores, lane-dense MXU output columns).
    w_t = jnp.transpose(fc_weight, (1, 0))                      # (C, N)
    w_pad = jnp.pad(w_t, ((0, 0), (0, N_PAD - n)))              # (C, 128)
    b_pad = jnp.pad(fc_bias, (0, N_PAD - n)).reshape(1, N_PAD)  # (1, 128)

    # Batch tile: whole batch if small / not 8-aligned, else sublane-aligned 8.
    tb = b if (b <= 8 or b % 8 != 0) else 8
    n_b = pl.cdiv(b, tb)

    # Channel tile sized for the smallest default scoped VMEM (v5e: 16 MiB),
    # 2 buffers * block <= ~12 MiB.
    tc = _pick_channel_tile(tb, c, hw, budget_bytes=12 * 1024 * 1024)
    n_c = pl.cdiv(c, tc)

    kernel = functools.partial(_classifier_kernel, inv_hw=1.0 / float(hw))

    out = pl.pallas_call(
        kernel,
        out_shape=jax.ShapeDtypeStruct((b, N_PAD), jnp.float32),
        grid_spec=pltpu.PrefetchScalarGridSpec(
            num_scalar_prefetch=0,
            grid=(n_b, n_c),  # (batch-parallel, channel-reduction)
            in_specs=[
                pl.BlockSpec((tb, tc, hw), lambda i, k: (i, k, 0)),
                pl.BlockSpec((tc, N_PAD), lambda i, k: (k, 0)),
                pl.BlockSpec((1, N_PAD), lambda i, k: (0, 0)),
            ],
            out_specs=pl.BlockSpec((tb, N_PAD), lambda i, k: (i, 0)),
            scratch_shapes=[pltpu.VMEM((tb, N_PAD), jnp.float32)],
        ),
        compiler_params=pltpu.CompilerParams(
            dimension_semantics=("parallel", "arbitrary"),
            vmem_limit_bytes=32 * 1024 * 1024,
        ),
    )(x_bchw, w_pad, b_pad)

    return out[:, :n]  # drop lane padding (free slice)


def _reference(x_nchw, fc_weight, fc_bias):
    # Pure-JAX reference mirroring the PyTorch forward.
    pooled = jnp.mean(x_nchw, axis=(2, 3))          # AdaptiveAvgPool2d((1,1)) + view
    return pooled @ fc_weight.T + fc_bias           # nn.Linear


if __name__ == "__main__":
    key = jax.random.PRNGKey(0)
    k_x, k_w, k_b = jax.random.split(key, 3)

    # Small shapes consistent with the module: Classifier(1024, 9) forces
    # C = 1024 feature channels; keep batch / spatial small.
    B, C, H, W = 2, IN_FEATURES, 4, 4
    x = jax.random.normal(k_x, (B, C, H, W), dtype=jnp.float32)

    # nn.Linear-shaped parameters: (out, in), (out,)
    bound = 1.0 / (IN_FEATURES ** 0.5)
    fc_weight = jax.random.uniform(
        k_w, (N_CLASSES, IN_FEATURES), minval=-bound, maxval=bound,
        dtype=jnp.float32)
    fc_bias = jax.random.uniform(
        k_b, (N_CLASSES,), minval=-bound, maxval=bound, dtype=jnp.float32)

    out = darknet_classifier_forward(x, fc_weight, fc_bias)
    out = jax.block_until_ready(out)

    ref = _reference(x, fc_weight, fc_bias)
    assert out.shape == (B, N_CLASSES)
    assert jnp.allclose(out, ref, atol=1e-4, rtol=1e-5), "mismatch vs reference"

    print("KERNEL_OK")
</pallas_src>

<mosaic_0001>
module attributes {stable_mosaic.version = 11 : i64} {
  func.func @_classifier_kernel(%arg0: i32, %arg1: i32, %arg2: memref<2x1024x16xf32, #tpu.memory_space<vmem>>, %arg3: memref<1024x128xf32, #tpu.memory_space<vmem>>, %arg4: memref<1x128xf32, #tpu.memory_space<vmem>>, %arg5: memref<2x128xf32, #tpu.memory_space<vmem>>, %arg6: memref<2x128xf32, #tpu.memory_space<vmem>>) attributes {dimension_semantics = [#tpu.dimension_semantics<parallel>, #tpu.dimension_semantics<arbitrary>], iteration_bounds = array<i64: 1, 1>, scalar_prefetch = 0 : i64, scratch_operands = 1 : i64, tpu.core_type = #tpu.core_type<tc>, window_params = [{transform_indices = @transform_0, window_bounds = array<i64: 2, 1024, 16>}, {transform_indices = @transform_1, window_bounds = array<i64: 1024, 128>}, {pipeline_mode = #tpu.pipeline_mode<synchronous>, transform_indices = @transform_2, window_bounds = array<i64: 1, 128>}, {transform_indices = @transform_3, window_bounds = array<i64: 2, 128>}]} {
    %c0_i32 = arith.constant 0 : i32
    %0 = arith.cmpi eq, %arg1, %c0_i32 : i32
    %1 = arith.extui %0 : i1 to i32
    %c0_i32_0 = arith.constant 0 : i32
    %2 = arith.cmpi ne, %1, %c0_i32_0 : i32
    scf.if %2 {
      %cst_12 = arith.constant 0.000000e+00 : f32
      %13 = vector.broadcast %cst_12 : f32 to vector<2x128xf32>
      %c0_13 = arith.constant 0 : index
      %c0_14 = arith.constant 0 : index
      %14 = vector.load %arg6[%c0_13, %c0_14] : memref<2x128xf32, #tpu.memory_space<vmem>>, vector<2x128xf32>
      tpu.vector_store %arg6[%c0_13, %c0_14], %13 {strides = array<i32>} : memref<2x128xf32, #tpu.memory_space<vmem>>, vector<2x128xf32>,
    } else {
    }
    %c0 = arith.constant 0 : index
    %c0_1 = arith.constant 0 : index
    %c0_2 = arith.constant 0 : index
    %3 = vector.load %arg2[%c0, %c0_1, %c0_2] : memref<2x1024x16xf32, #tpu.memory_space<vmem>>, vector<2x1024x16xf32>
    %cst = arith.constant dense<0.000000e+00> : vector<2x1024xf32>
    %4 = vector.multi_reduction <add>, %3, %cst [2] : vector<2x1024x16xf32> to vector<2x1024xf32>
    %c0_3 = arith.constant 0 : index
    %c0_4 = arith.constant 0 : index
    %5 = vector.load %arg6[%c0_3, %c0_4] : memref<2x128xf32, #tpu.memory_space<vmem>>, vector<2x128xf32>
    %c0_5 = arith.constant 0 : index
    %c0_6 = arith.constant 0 : index
    %6 = vector.load %arg3[%c0_5, %c0_6] : memref<1024x128xf32, #tpu.memory_space<vmem>>, vector<1024x128xf32>
    %cst_7 = arith.constant dense<0.000000e+00> : vector<2x128xf32>
    %7 = tpu.matmul %4, %6, %cst_7 {dimension_numbers = #tpu.dot_dimension_numbers<[1], [0], [0], [1], [0, 0, 1, 1], [], []>} : vector<2x1024xf32>, vector<1024x128xf32>, vector<2x128xf32> -> vector<2x128xf32>
    %8 = arith.addf %5, %7 : vector<2x128xf32>
    %c0_8 = arith.constant 0 : index
    %c0_9 = arith.constant 0 : index
    %9 = vector.load %arg6[%c0_8, %c0_9] : memref<2x128xf32, #tpu.memory_space<vmem>>, vector<2x128xf32>
    tpu.vector_store %arg6[%c0_8, %c0_9], %8 {strides = array<i32>} : memref<2x128xf32, #tpu.memory_space<vmem>>, vector<2x128xf32>,
    %c0_i32_10 = arith.constant 0 : i32
    %10 = arith.cmpi eq, %arg1, %c0_i32_10 : i32
    %11 = arith.extui %10 : i1 to i32
    %c0_i32_11 = arith.constant 0 : i32
    %12 = arith.cmpi ne, %11, %c0_i32_11 : i32
    scf.if %12 {
      %c0_12 = arith.constant 0 : index
      %c0_13 = arith.constant 0 : index
      %13 = vector.load %arg6[%c0_12, %c0_13] : memref<2x128xf32, #tpu.memory_space<vmem>>, vector<2x128xf32>
      %cst_14 = arith.constant 6.250000e-02 : f32
      %14 = vector.broadcast %cst_14 : f32 to vector<2x128xf32>
      %15 = arith.mulf %13, %14 : vector<2x128xf32>
      %c0_15 = arith.constant 0 : index
      %c0_16 = arith.constant 0 : index
      %16 = vector.load %arg4[%c0_15, %c0_16] : memref<1x128xf32, #tpu.memory_space<vmem>>, vector<1x128xf32>
      %17 = vector.broadcast %16 : vector<1x128xf32> to vector<2x128xf32>
      %18 = arith.addf %15, %17 : vector<2x128xf32>
      %c0_17 = arith.constant 0 : index
      %c0_18 = arith.constant 0 : index
      %19 = vector.load %arg5[%c0_17, %c0_18] : memref<2x128xf32, #tpu.memory_space<vmem>>, vector<2x128xf32>
      tpu.vector_store %arg5[%c0_17, %c0_18], %18 {strides = array<i32>} : memref<2x128xf32, #tpu.memory_space<vmem>>, vector<2x128xf32>,
    } else {
    }
    return
  }
  func.func @transform_0(%arg0: i32, %arg1: i32) -> (i32, i32, i32) {
    %c0_i32 = arith.constant 0 : i32
    %c0_i32_0 = arith.constant 0 : i32
    return %arg0, %arg1, %c0_i32 : i32, i32, i32
  }
  func.func @transform_1(%arg0: i32, %arg1: i32) -> (i32, i32) {
    %c0_i32 = arith.constant 0 : i32
    %c0_i32_0 = arith.constant 0 : i32
    return %arg1, %c0_i32 : i32, i32
  }
  func.func @transform_2(%arg0: i32, %arg1: i32) -> (i32, i32) {
    %c0_i32 = arith.constant 0 : i32
    %c0_i32_0 = arith.constant 0 : i32
    %c0_i32_1 = arith.constant 0 : i32
    return %c0_i32, %c0_i32_0 : i32, i32
  }
  func.func @transform_3(%arg0: i32, %arg1: i32) -> (i32, i32) {
    %c0_i32 = arith.constant 0 : i32
    %c0_i32_0 = arith.constant 0 : i32
    return %arg0, %c0_i32 : i32, i32
  }
}

</mosaic_0001>

<llo_original>
// kernel: tpu_custom_call.1
$region0: #{tpu_custom_call.1}
  #allocation0 [shape = 'u32[]', space=smem, size = 0x4, offset = 0x4, fixed_abs, tag = 'smem constant byte address 0x4 - core index']
  #allocation1 [shape = 'u32[144,128]{1,0:T(1,128)}', space=vmem, size = 0x12000, scoped, tag = 'internal scratch']
  #allocation2 [shape = 'f32[2,128]{1,0:T(2,128)}', space=vmem, size = 0x400, scoped, tag = 'scratch operand']
  %s0 = inlined_call_operand.vmem [shape: f32[2,1024,16], index: 0, kind: input, shape index: {}]
  %s1 = inlined_call_operand.vmem [shape: f32[1024,128], index: 1, kind: input, shape index: {}]
  %s2 = inlined_call_operand.vmem [shape: f32[1,128], index: 2, kind: input, shape index: {}]
  %s3 = inlined_call_operand.hbm [shape: f32[2,128], index: 3, kind: output, shape index: {}]
  %s4 = sld [smem:[#allocation0]]
  $region30: #{tpu_custom_call.1} parent=0
    _
  %s6 = ssub.s32 1, %s4
  %s7 = scalar_select 0, %s6, %s4
  $region1: #{tpu_custom_call.1} parent=0
    #allocation3 [shape = 'u8[1024]{0}', space=vmem, size = 0x400, scoped, tag = 'output window, operand 0, single buffered']
    #allocation4 [shape = 's32[1]{0}', space=sflag, size = 0x4, scoped, tag = 'scoped memory for tpu_custom_call.1']
    %8 = vsyncpa [#allocation4], 0
    // Predicated region
    $region2: #{tpu_custom_call.1} parent=1 // pred_check
      _
    $region3: #{tpu_custom_call.1} parent=1 // pred_check_branch
      %10 = sbr.rel (0) target = $region5
    $region4: #{tpu_custom_call.1} parent=1 // pred_region
      _
    $region5: #{tpu_custom_call.1} parent=1 // pred_fallthru
      _
    // Predicated region
    $region6: #{tpu_custom_call.1} parent=1 // pred_check
      _
    $region7: #{tpu_custom_call.1} parent=1 // pred_check_branch
      %12 = sbr.rel (0) target = $region9
    $region8: #{tpu_custom_call.1} parent=1 // pred_region
      _
    $region9: #{tpu_custom_call.1} parent=1 // pred_fallthru
      _
    // Predicated region
    $region10: #{tpu_custom_call.1} parent=1 // pred_check
      _
    $region11: #{tpu_custom_call.1} parent=1 // pred_check_branch
      %14 = sbr.rel (0) target = $region13
    $region12: #{tpu_custom_call.1} parent=1 // pred_region
      _
    $region13: #{tpu_custom_call.1} parent=1 // pred_fallthru
      _
    %p15 = scmp.eq.s32.totalorder 0, 0
    // Predicated region
    $region14: #{tpu_custom_call.1} parent=1 // pred_check
      %p16 = pneg %p15
    $region15: #{tpu_custom_call.1} parent=1 // pred_check_branch
      %18 = sbr.rel (%p16) target = $region17
    $region16: #{tpu_custom_call.1} parent=1 // pred_region
      %19 = vst [vmem:[#allocation2] sm:$0x3] 0.0
    $region17: #{tpu_custom_call.1} parent=1 // pred_fallthru
      _
    %v20 = vld [vmem:[%s0] sm:$0xff]
    %v21 = vld [vmem:[%s0 + $0x8] sm:$0xff]
    %v22 = vld [vmem:[%s0 + $0x10] sm:$0xff]
    %v23 = vld [vmem:[%s0 + $0x18] sm:$0xff]
    %v24 = vld [vmem:[%s0 + $0x20] sm:$0xff]
    %v25 = vld [vmem:[%s0 + $0x28] sm:$0xff]
    %v26 = vld [vmem:[%s0 + $0x30] sm:$0xff]
    %v27 = vld [vmem:[%s0 + $0x38] sm:$0xff]
    %v28 = vld [vmem:[%s0 + $0x40] sm:$0xff]
    %v29 = vld [vmem:[%s0 + $0x48] sm:$0xff]
    %v30 = vld [vmem:[%s0 + $0x50] sm:$0xff]
    %v31 = vld [vmem:[%s0 + $0x58] sm:$0xff]
    %v32 = vld [vmem:[%s0 + $0x60] sm:$0xff]
    %v33 = vld [vmem:[%s0 + $0x68] sm:$0xff]
    %v34 = vld [vmem:[%s0 + $0x70] sm:$0xff]
    %v35 = vld [vmem:[%s0 + $0x78] sm:$0xff]
    %v36 = vld [vmem:[%s0 + $0x80] sm:$0xff]
    %v37 = vld [vmem:[%s0 + $0x88] sm:$0xff]
    %v38 = vld [vmem:[%s0 + $0x90] sm:$0xff]
    %v39 = vld [vmem:[%s0 + $0x98] sm:$0xff]
    %v40 = vld [vmem:[%s0 + $0xa0] sm:$0xff]
    %v41 = vld [vmem:[%s0 + $0xa8] sm:$0xff]
    %v42 = vld [vmem:[%s0 + $0xb0] sm:$0xff]
    %v43 = vld [vmem:[%s0 + $0xb8] sm:$0xff]
    %v44 = vld [vmem:[%s0 + $0xc0] sm:$0xff]
    %v45 = vld [vmem:[%s0 + $0xc8] sm:$0xff]
    %v46 = vld [vmem:[%s0 + $0xd0] sm:$0xff]
    %v47 = vld [vmem:[%s0 + $0xd8] sm:$0xff]
    %v48 = vld [vmem:[%s0 + $0xe0] sm:$0xff]
    %v49 = vld [vmem:[%s0 + $0xe8] sm:$0xff]
    %v50 = vld [vmem:[%s0 + $0xf0] sm:$0xff]
    %v51 = vld [vmem:[%s0 + $0xf8] sm:$0xff]
    %v52 = vld [vmem:[%s0 + $0x100] sm:$0xff]
    %v53 = vld [vmem:[%s0 + $0x108] sm:$0xff]
    %v54 = vld [vmem:[%s0 + $0x110] sm:$0xff]
    %v55 = vld [vmem:[%s0 + $0x118] sm:$0xff]
    %v56 = vld [vmem:[%s0 + $0x120] sm:$0xff]
    %v57 = vld [vmem:[%s0 + $0x128] sm:$0xff]
    %v58 = vld [vmem:[%s0 + $0x130] sm:$0xff]
    %v59 = vld [vmem:[%s0 + $0x138] sm:$0xff]
    %v60 = vld [vmem:[%s0 + $0x140] sm:$0xff]
    %v61 = vld [vmem:[%s0 + $0x148] sm:$0xff]
    %v62 = vld [vmem:[%s0 + $0x150] sm:$0xff]
    %v63 = vld [vmem:[%s0 + $0x158] sm:$0xff]
    %v64 = vld [vmem:[%s0 + $0x160] sm:$0xff]
    %v65 = vld [vmem:[%s0 + $0x168] sm:$0xff]
    %v66 = vld [vmem:[%s0 + $0x170] sm:$0xff]
    %v67 = vld [vmem:[%s0 + $0x178] sm:$0xff]
    %v68 = vld [vmem:[%s0 + $0x180] sm:$0xff]
    %v69 = vld [vmem:[%s0 + $0x188] sm:$0xff]
    %v70 = vld [vmem:[%s0 + $0x190] sm:$0xff]
    %v71 = vld [vmem:[%s0 + $0x198] sm:$0xff]
    %v72 = vld [vmem:[%s0 + $0x1a0] sm:$0xff]
    %v73 = vld [vmem:[%s0 + $0x1a8] sm:$0xff]
    %v74 = vld [vmem:[%s0 + $0x1b0] sm:$0xff]
    %v75 = vld [vmem:[%s0 + $0x1b8] sm:$0xff]
    %v76 = vld [vmem:[%s0 + $0x1c0] sm:$0xff]
    %v77 = vld [vmem:[%s0 + $0x1c8] sm:$0xff]
    %v78 = vld [vmem:[%s0 + $0x1d0] sm:$0xff]
    %v79 = vld [vmem:[%s0 + $0x1d8] sm:$0xff]
    %v80 = vld [vmem:[%s0 + $0x1e0] sm:$0xff]
    %v81 = vld [vmem:[%s0 + $0x1e8] sm:$0xff]
    %v82 = vld [vmem:[%s0 + $0x1f0] sm:$0xff]
    %v83 = vld [vmem:[%s0 + $0x1f8] sm:$0xff]
    %v84 = vld [vmem:[%s0 + $0x200] sm:$0xff]
    %v85 = vld [vmem:[%s0 + $0x208] sm:$0xff]
    %v86 = vld [vmem:[%s0 + $0x210] sm:$0xff]
    %v87 = vld [vmem:[%s0 + $0x218] sm:$0xff]
    %v88 = vld [vmem:[%s0 + $0x220] sm:$0xff]
    %v89 = vld [vmem:[%s0 + $0x228] sm:$0xff]
    %v90 = vld [vmem:[%s0 + $0x230] sm:$0xff]
    %v91 = vld [vmem:[%s0 + $0x238] sm:$0xff]
    %v92 = vld [vmem:[%s0 + $0x240] sm:$0xff]
    %v93 = vld [vmem:[%s0 + $0x248] sm:$0xff]
    %v94 = vld [vmem:[%s0 + $0x250] sm:$0xff]
    %v95 = vld [vmem:[%s0 + $0x258] sm:$0xff]
    %v96 = vld [vmem:[%s0 + $0x260] sm:$0xff]
    %v97 = vld [vmem:[%s0 + $0x268] sm:$0xff]
    %v98 = vld [vmem:[%s0 + $0x270] sm:$0xff]
    %v99 = vld [vmem:[%s0 + $0x278] sm:$0xff]
    %v100 = vld [vmem:[%s0 + $0x280] sm:$0xff]
    %v101 = vld [vmem:[%s0 + $0x288] sm:$0xff]
    %v102 = vld [vmem:[%s0 + $0x290] sm:$0xff]
    %v103 = vld [vmem:[%s0 + $0x298] sm:$0xff]
    %v104 = vld [vmem:[%s0 + $0x2a0] sm:$0xff]
    %v105 = vld [vmem:[%s0 + $0x2a8] sm:$0xff]
    %v106 = vld [vmem:[%s0 + $0x2b0] sm:$0xff]
    %v107 = vld [vmem:[%s0 + $0x2b8] sm:$0xff]
    %v108 = vld [vmem:[%s0 + $0x2c0] sm:$0xff]
    %v109 = vld [vmem:[%s0 + $0x2c8] sm:$0xff]
    %v110 = vld [vmem:[%s0 + $0x2d0] sm:$0xff]
    %v111 = vld [vmem:[%s0 + $0x2d8] sm:$0xff]
    %v112 = vld [vmem:[%s0 + $0x2e0] sm:$0xff]
    %v113 = vld [vmem:[%s0 + $0x2e8] sm:$0xff]
    %v114 = vld [vmem:[%s0 + $0x2f0] sm:$0xff]
    %v115 = vld [vmem:[%s0 + $0x2f8] sm:$0xff]
    %v116 = vld [vmem:[%s0 + $0x300] sm:$0xff]
    %v117 = vld [vmem:[%s0 + $0x308] sm:$0xff]
    %v118 = vld [vmem:[%s0 + $0x310] sm:$0xff]
    %v119 = vld [vmem:[%s0 + $0x318] sm:$0xff]
    %v120 = vld [vmem:[%s0 + $0x320] sm:$0xff]
    %v121 = vld [vmem:[%s0 + $0x328] sm:$0xff]
    %v122 = vld [vmem:[%s0 + $0x330] sm:$0xff]
    %v123 = vld [vmem:[%s0 + $0x338] sm:$0xff]
    %v124 = vld [vmem:[%s0 + $0x340] sm:$0xff]
    %v125 = vld [vmem:[%s0 + $0x348] sm:$0xff]
    %v126 = vld [vmem:[%s0 + $0x350] sm:$0xff]
    %v127 = vld [vmem:[%s0 + $0x358] sm:$0xff]
    %v128 = vld [vmem:[%s0 + $0x360] sm:$0xff]
    %v129 = vld [vmem:[%s0 + $0x368] sm:$0xff]
    %v130 = vld [vmem:[%s0 + $0x370] sm:$0xff]
    %v131 = vld [vmem:[%s0 + $0x378] sm:$0xff]
    %v132 = vld [vmem:[%s0 + $0x380] sm:$0xff]
    %v133 = vld [vmem:[%s0 + $0x388] sm:$0xff]
    %v134 = vld [vmem:[%s0 + $0x390] sm:$0xff]
    %v135 = vld [vmem:[%s0 + $0x398] sm:$0xff]
    %v136 = vld [vmem:[%s0 + $0x3a0] sm:$0xff]
    %v137 = vld [vmem:[%s0 + $0x3a8] sm:$0xff]
    %v138 = vld [vmem:[%s0 + $0x3b0] sm:$0xff]
    %v139 = vld [vmem:[%s0 + $0x3b8] sm:$0xff]
    %v140 = vld [vmem:[%s0 + $0x3c0] sm:$0xff]
    %v141 = vld [vmem:[%s0 + $0x3c8] sm:$0xff]
    %v142 = vld [vmem:[%s0 + $0x3d0] sm:$0xff]
    %v143 = vld [vmem:[%s0 + $0x3d8] sm:$0xff]
    %v144 = vld [vmem:[%s0 + $0x3e0] sm:$0xff]
    %v145 = vld [vmem:[%s0 + $0x3e8] sm:$0xff]
    %v146 = vld [vmem:[%s0 + $0x3f0] sm:$0xff]
    %v147 = vld [vmem:[%s0 + $0x3f8] sm:$0xff]
    %v148 = vld [vmem:[%s0 + $0x400] sm:$0xff]
    %v149 = vld [vmem:[%s0 + $0x408] sm:$0xff]
    %v150 = vld [vmem:[%s0 + $0x410] sm:$0xff]
    %v151 = vld [vmem:[%s0 + $0x418] sm:$0xff]
    %v152 = vld [vmem:[%s0 + $0x420] sm:$0xff]
    %v153 = vld [vmem:[%s0 + $0x428] sm:$0xff]
    %v154 = vld [vmem:[%s0 + $0x430] sm:$0xff]
    %v155 = vld [vmem:[%s0 + $0x438] sm:$0xff]
    %v156 = vld [vmem:[%s0 + $0x440] sm:$0xff]
    %v157 = vld [vmem:[%s0 + $0x448] sm:$0xff]
    %v158 = vld [vmem:[%s0 + $0x450] sm:$0xff]
    %v159 = vld [vmem:[%s0 + $0x458] sm:$0xff]
    %v160 = vld [vmem:[%s0 + $0x460] sm:$0xff]
    %v161 = vld [vmem:[%s0 + $0x468] sm:$0xff]
    %v162 = vld [vmem:[%s0 + $0x470] sm:$0xff]
    %v163 = vld [vmem:[%s0 + $0x478] sm:$0xff]
    %v164 = vld [vmem:[%s0 + $0x480] sm:$0xff]
    %v165 = vld [vmem:[%s0 + $0x488] sm:$0xff]
    %v166 = vld [vmem:[%s0 + $0x490] sm:$0xff]
    %v167 = vld [vmem:[%s0 + $0x498] sm:$0xff]
    %v168 = vld [vmem:[%s0 + $0x4a0] sm:$0xff]
    %v169 = vld [vmem:[%s0 + $0x4a8] sm:$0xff]
    %v170 = vld [vmem:[%s0 + $0x4b0] sm:$0xff]
    %v171 = vld [vmem:[%s0 + $0x4b8] sm:$0xff]
    %v172 = vld [vmem:[%s0 + $0x4c0] sm:$0xff]
    %v173 = vld [vmem:[%s0 + $0x4c8] sm:$0xff]
    %v174 = vld [vmem:[%s0 + $0x4d0] sm:$0xff]
    %v175 = vld [vmem:[%s0 + $0x4d8] sm:$0xff]
    %v176 = vld [vmem:[%s0 + $0x4e0] sm:$0xff]
    %v177 = vld [vmem:[%s0 + $0x4e8] sm:$0xff]
    %v178 = vld [vmem:[%s0 + $0x4f0] sm:$0xff]
    %v179 = vld [vmem:[%s0 + $0x4f8] sm:$0xff]
    %v180 = vld [vmem:[%s0 + $0x500] sm:$0xff]
    %v181 = vld [vmem:[%s0 + $0x508] sm:$0xff]
    %v182 = vld [vmem:[%s0 + $0x510] sm:$0xff]
    %v183 = vld [vmem:[%s0 + $0x518] sm:$0xff]
    %v184 = vld [vmem:[%s0 + $0x520] sm:$0xff]
    %v185 = vld [vmem:[%s0 + $0x528] sm:$0xff]
    %v186 = vld [vmem:[%s0 + $0x530] sm:$0xff]
    %v187 = vld [vmem:[%s0 + $0x538] sm:$0xff]
    %v188 = vld [vmem:[%s0 + $0x540] sm:$0xff]
    %v189 = vld [vmem:[%s0 + $0x548] sm:$0xff]
    %v190 = vld [vmem:[%s0 + $0x550] sm:$0xff]
    %v191 = vld [vmem:[%s0 + $0x558] sm:$0xff]
    %v192 = vld [vmem:[%s0 + $0x560] sm:$0xff]
    %v193 = vld [vmem:[%s0 + $0x568] sm:$0xff]
    %v194 = vld [vmem:[%s0 + $0x570] sm:$0xff]
    %v195 = vld [vmem:[%s0 + $0x578] sm:$0xff]
    %v196 = vld [vmem:[%s0 + $0x580] sm:$0xff]
    %v197 = vld [vmem:[%s0 + $0x588] sm:$0xff]
    %v198 = vld [vmem:[%s0 + $0x590] sm:$0xff]
    %v199 = vld [vmem:[%s0 + $0x598] sm:$0xff]
    %v200 = vld [vmem:[%s0 + $0x5a0] sm:$0xff]
    %v201 = vld [vmem:[%s0 + $0x5a8] sm:$0xff]
    %v202 = vld [vmem:[%s0 + $0x5b0] sm:$0xff]
    %v203 = vld [vmem:[%s0 + $0x5b8] sm:$0xff]
    %v204 = vld [vmem:[%s0 + $0x5c0] sm:$0xff]
    %v205 = vld [vmem:[%s0 + $0x5c8] sm:$0xff]
    %v206 = vld [vmem:[%s0 + $0x5d0] sm:$0xff]
    %v207 = vld [vmem:[%s0 + $0x5d8] sm:$0xff]
    %v208 = vld [vmem:[%s0 + $0x5e0] sm:$0xff]
    %v209 = vld [vmem:[%s0 + $0x5e8] sm:$0xff]
    %v210 = vld [vmem:[%s0 + $0x5f0] sm:$0xff]
    %v211 = vld [vmem:[%s0 + $0x5f8] sm:$0xff]
    %v212 = vld [vmem:[%s0 + $0x600] sm:$0xff]
    %v213 = vld [vmem:[%s0 + $0x608] sm:$0xff]
    %v214 = vld [vmem:[%s0 + $0x610] sm:$0xff]
    %v215 = vld [vmem:[%s0 + $0x618] sm:$0xff]
    %v216 = vld [vmem:[%s0 + $0x620] sm:$0xff]
    %v217 = vld [vmem:[%s0 + $0x628] sm:$0xff]
    %v218 = vld [vmem:[%s0 + $0x630] sm:$0xff]
    %v219 = vld [vmem:[%s0 + $0x638] sm:$0xff]
    %v220 = vld [vmem:[%s0 + $0x640] sm:$0xff]
    %v221 = vld [vmem:[%s0 + $0x648] sm:$0xff]
    %v222 = vld [vmem:[%s0 + $0x650] sm:$0xff]
    %v223 = vld [vmem:[%s0 + $0x658] sm:$0xff]
    %v224 = vld [vmem:[%s0 + $0x660] sm:$0xff]
    %v225 = vld [vmem:[%s0 + $0x668] sm:$0xff]
    %v226 = vld [vmem:[%s0 + $0x670] sm:$0xff]
    %v227 = vld [vmem:[%s0 + $0x678] sm:$0xff]
    %v228 = vld [vmem:[%s0 + $0x680] sm:$0xff]
    %v229 = vld [vmem:[%s0 + $0x688] sm:$0xff]
    %v230 = vld [vmem:[%s0 + $0x690] sm:$0xff]
    %v231 = vld [vmem:[%s0 + $0x698] sm:$0xff]
    %v232 = vld [vmem:[%s0 + $0x6a0] sm:$0xff]
    %v233 = vld [vmem:[%s0 + $0x6a8] sm:$0xff]
    %v234 = vld [vmem:[%s0 + $0x6b0] sm:$0xff]
    %v235 = vld [vmem:[%s0 + $0x6b8] sm:$0xff]
    %v236 = vld [vmem:[%s0 + $0x6c0] sm:$0xff]
    %v237 = vld [vmem:[%s0 + $0x6c8] sm:$0xff]
    %v238 = vld [vmem:[%s0 + $0x6d0] sm:$0xff]
    %v239 = vld [vmem:[%s0 + $0x6d8] sm:$0xff]
    %v240 = vld [vmem:[%s0 + $0x6e0] sm:$0xff]
    %v241 = vld [vmem:[%s0 + $0x6e8] sm:$0xff]
    %v242 = vld [vmem:[%s0 + $0x6f0] sm:$0xff]
    %v243 = vld [vmem:[%s0 + $0x6f8] sm:$0xff]
    %v244 = vld [vmem:[%s0 + $0x700] sm:$0xff]
    %v245 = vld [vmem:[%s0 + $0x708] sm:$0xff]
    %v246 = vld [vmem:[%s0 + $0x710] sm:$0xff]
    %v247 = vld [vmem:[%s0 + $0x718] sm:$0xff]
    %v248 = vld [vmem:[%s0 + $0x720] sm:$0xff]
    %v249 = vld [vmem:[%s0 + $0x728] sm:$0xff]
    %v250 = vld [vmem:[%s0 + $0x730] sm:$0xff]
    %v251 = vld [vmem:[%s0 + $0x738] sm:$0xff]
    %v252 = vld [vmem:[%s0 + $0x740] sm:$0xff]
    %v253 = vld [vmem:[%s0 + $0x748] sm:$0xff]
    %v254 = vld [vmem:[%s0 + $0x750] sm:$0xff]
    %v255 = vld [vmem:[%s0 + $0x758] sm:$0xff]
    %v256 = vld [vmem:[%s0 + $0x760] sm:$0xff]
    %v257 = vld [vmem:[%s0 + $0x768] sm:$0xff]
    %v258 = vld [vmem:[%s0 + $0x770] sm:$0xff]
    %v259 = vld [vmem:[%s0 + $0x778] sm:$0xff]
    %v260 = vld [vmem:[%s0 + $0x780] sm:$0xff]
    %v261 = vld [vmem:[%s0 + $0x788] sm:$0xff]
    %v262 = vld [vmem:[%s0 + $0x790] sm:$0xff]
    %v263 = vld [vmem:[%s0 + $0x798] sm:$0xff]
    %v264 = vld [vmem:[%s0 + $0x7a0] sm:$0xff]
    %v265 = vld [vmem:[%s0 + $0x7a8] sm:$0xff]
    %v266 = vld [vmem:[%s0 + $0x7b0] sm:$0xff]
    %v267 = vld [vmem:[%s0 + $0x7b8] sm:$0xff]
    %v268 = vld [vmem:[%s0 + $0x7c0] sm:$0xff]
    %v269 = vld [vmem:[%s0 + $0x7c8] sm:$0xff]
    %v270 = vld [vmem:[%s0 + $0x7d0] sm:$0xff]
    %v271 = vld [vmem:[%s0 + $0x7d8] sm:$0xff]
    %v272 = vld [vmem:[%s0 + $0x7e0] sm:$0xff]
    %v273 = vld [vmem:[%s0 + $0x7e8] sm:$0xff]
    %v274 = vld [vmem:[%s0 + $0x7f0] sm:$0xff]
    %v275 = vld [vmem:[%s0 + $0x7f8] sm:$0xff]
    %vm276 = vcmask 130048
    %v277 = vsel %vm276, %v20, 0.0
    %278 = vadd.xlane.f32.xlu0 %v277
    %v279 = vpop.xlane.xlu0 %278
    %v280 = vsel %vm276, %v21, 0.0
    %281 = vadd.xlane.f32.xlu0 %v280
    %v282 = vpop.xlane.xlu0 %281
    %v283 = vsel %vm276, %v22, 0.0
    %284 = vadd.xlane.f32.xlu0 %v283
    %v285 = vpop.xlane.xlu0 %284
    %v286 = vsel %vm276, %v23, 0.0
    %287 = vadd.xlane.f32.xlu0 %v286
    %v288 = vpop.xlane.xlu0 %287
    %v289 = vsel %vm276, %v24, 0.0
    %290 = vadd.xlane.f32.xlu0 %v289
    %v291 = vpop.xlane.xlu0 %290
    %v292 = vsel %vm276, %v25, 0.0
    %293 = vadd.xlane.f32.xlu0 %v292
    %v294 = vpop.xlane.xlu0 %293
    %v295 = vsel %vm276, %v26, 0.0
    %296 = vadd.xlane.f32.xlu0 %v295
    %v297 = vpop.xlane.xlu0 %296
    %v298 = vsel %vm276, %v27, 0.0
    %299 = vadd.xlane.f32.xlu0 %v298
    %v300 = vpop.xlane.xlu0 %299
    %v301 = vsel %vm276, %v28, 0.0
    %302 = vadd.xlane.f32.xlu0 %v301
    %v303 = vpop.xlane.xlu0 %302
    %v304 = vsel %vm276, %v29, 0.0
    %305 = vadd.xlane.f32.xlu0 %v304
    %v306 = vpop.xlane.xlu0 %305
    %v307 = vsel %vm276, %v30, 0.0
    %308 = vadd.xlane.f32.xlu0 %v307
    %v309 = vpop.xlane.xlu0 %308
    %v310 = vsel %vm276, %v31, 0.0
    %311 = vadd.xlane.f32.xlu0 %v310
    %v312 = vpop.xlane.xlu0 %311
    %v313 = vsel %vm276, %v32, 0.0
    %314 = vadd.xlane.f32.xlu0 %v313
    %v315 = vpop.xlane.xlu0 %314
    %v316 = vsel %vm276, %v33, 0.0
    %317 = vadd.xlane.f32.xlu0 %v316
    %v318 = vpop.xlane.xlu0 %317
    %v319 = vsel %vm276, %v34, 0.0
    %320 = vadd.xlane.f32.xlu0 %v319
    %v321 = vpop.xlane.xlu0 %320
    %v322 = vsel %vm276, %v35, 0.0
    %323 = vadd.xlane.f32.xlu0 %v322
    %v324 = vpop.xlane.xlu0 %323
    %v325 = vsel %vm276, %v36, 0.0
    %326 = vadd.xlane.f32.xlu0 %v325
    %v327 = vpop.xlane.xlu0 %326
    %v328 = vsel %vm276, %v37, 0.0
    %329 = vadd.xlane.f32.xlu0 %v328
    %v330 = vpop.xlane.xlu0 %329
    %v331 = vsel %vm276, %v38, 0.0
    %332 = vadd.xlane.f32.xlu0 %v331
    %v333 = vpop.xlane.xlu0 %332
    %v334 = vsel %vm276, %v39, 0.0
    %335 = vadd.xlane.f32.xlu0 %v334
    %v336 = vpop.xlane.xlu0 %335
    %v337 = vsel %vm276, %v40, 0.0
    %338 = vadd.xlane.f32.xlu0 %v337
    %v339 = vpop.xlane.xlu0 %338
    %v340 = vsel %vm276, %v41, 0.0
    %341 = vadd.xlane.f32.xlu0 %v340
    %v342 = vpop.xlane.xlu0 %341
    %v343 = vsel %vm276, %v42, 0.0
    %344 = vadd.xlane.f32.xlu0 %v343
    %v345 = vpop.xlane.xlu0 %344
    %v346 = vsel %vm276, %v43, 0.0
    %347 = vadd.xlane.f32.xlu0 %v346
    %v348 = vpop.xlane.xlu0 %347
    %v349 = vsel %vm276, %v44, 0.0
    %350 = vadd.xlane.f32.xlu0 %v349
    %v351 = vpop.xlane.xlu0 %350
    %v352 = vsel %vm276, %v45, 0.0
    %353 = vadd.xlane.f32.xlu0 %v352
    %v354 = vpop.xlane.xlu0 %353
    %v355 = vsel %vm276, %v46, 0.0
    %356 = vadd.xlane.f32.xlu0 %v355
    %v357 = vpop.xlane.xlu0 %356
    %v358 = vsel %vm276, %v47, 0.0
    %359 = vadd.xlane.f32.xlu0 %v358
    %v360 = vpop.xlane.xlu0 %359
    %v361 = vsel %vm276, %v48, 0.0
    %362 = vadd.xlane.f32.xlu0 %v361
    %v363 = vpop.xlane.xlu0 %362
    %v364 = vsel %vm276, %v49, 0.0
    %365 = vadd.xlane.f32.xlu0 %v364
    %v366 = vpop.xlane.xlu0 %365
    %v367 = vsel %vm276, %v50, 0.0
    %368 = vadd.xlane.f32.xlu0 %v367
    %v369 = vpop.xlane.xlu0 %368
    %v370 = vsel %vm276, %v51, 0.0
    %371 = vadd.xlane.f32.xlu0 %v370
    %v372 = vpop.xlane.xlu0 %371
    %v373 = vsel %vm276, %v52, 0.0
    %374 = vadd.xlane.f32.xlu0 %v373
    %v375 = vpop.xlane.xlu0 %374
    %v376 = vsel %vm276, %v53, 0.0
    %377 = vadd.xlane.f32.xlu0 %v376
    %v378 = vpop.xlane.xlu0 %377
    %v379 = vsel %vm276, %v54, 0.0
    %380 = vadd.xlane.f32.xlu0 %v379
    %v381 = vpop.xlane.xlu0 %380
    %v382 = vsel %vm276, %v55, 0.0
    %383 = vadd.xlane.f32.xlu0 %v382
    %v384 = vpop.xlane.xlu0 %383
    %v385 = vsel %vm276, %v56, 0.0
    %386 = vadd.xlane.f32.xlu0 %v385
    %v387 = vpop.xlane.xlu0 %386
    %v388 = vsel %vm276, %v57, 0.0
    %389 = vadd.xlane.f32.xlu0 %v388
    %v390 = vpop.xlane.xlu0 %389
    %v391 = vsel %vm276, %v58, 0.0
    %392 = vadd.xlane.f32.xlu0 %v391
    %v393 = vpop.xlane.xlu0 %392
    %v394 = vsel %vm276, %v59, 0.0
    %395 = vadd.xlane.f32.xlu0 %v394
    %v396 = vpop.xlane.xlu0 %395
    %v397 = vsel %vm276, %v60, 0.0
    %398 = vadd.xlane.f32.xlu0 %v397
    %v399 = vpop.xlane.xlu0 %398
    %v400 = vsel %vm276, %v61, 0.0
    %401 = vadd.xlane.f32.xlu0 %v400
    %v402 = vpop.xlane.xlu0 %401
    %v403 = vsel %vm276, %v62, 0.0
    %404 = vadd.xlane.f32.xlu0 %v403
    %v405 = vpop.xlane.xlu0 %404
    %v406 = vsel %vm276, %v63, 0.0
    %407 = vadd.xlane.f32.xlu0 %v406
    %v408 = vpop.xlane.xlu0 %407
    %v409 = vsel %vm276, %v64, 0.0
    %410 = vadd.xlane.f32.xlu0 %v409
    %v411 = vpop.xlane.xlu0 %410
    %v412 = vsel %vm276, %v65, 0.0
    %413 = vadd.xlane.f32.xlu0 %v412
    %v414 = vpop.xlane.xlu0 %413
    %v415 = vsel %vm276, %v66, 0.0
    %416 = vadd.xlane.f32.xlu0 %v415
    %v417 = vpop.xlane.xlu0 %416
    %v418 = vsel %vm276, %v67, 0.0
    %419 = vadd.xlane.f32.xlu0 %v418
    %v420 = vpop.xlane.xlu0 %419
    %v421 = vsel %vm276, %v68, 0.0
    %422 = vadd.xlane.f32.xlu0 %v421
    %v423 = vpop.xlane.xlu0 %422
    %v424 = vsel %vm276, %v69, 0.0
    %425 = vadd.xlane.f32.xlu0 %v424
    %v426 = vpop.xlane.xlu0 %425
    %v427 = vsel %vm276, %v70, 0.0
    %428 = vadd.xlane.f32.xlu0 %v427
    %v429 = vpop.xlane.xlu0 %428
    %v430 = vsel %vm276, %v71, 0.0
    %431 = vadd.xlane.f32.xlu0 %v430
    %v432 = vpop.xlane.xlu0 %431
    %v433 = vsel %vm276, %v72, 0.0
    %434 = vadd.xlane.f32.xlu0 %v433
    %v435 = vpop.xlane.xlu0 %434
    %v436 = vsel %vm276, %v73, 0.0
    %437 = vadd.xlane.f32.xlu0 %v436
    %v438 = vpop.xlane.xlu0 %437
    %v439 = vsel %vm276, %v74, 0.0
    %440 = vadd.xlane.f32.xlu0 %v439
    %v441 = vpop.xlane.xlu0 %440
    %v442 = vsel %vm276, %v75, 0.0
    %443 = vadd.xlane.f32.xlu0 %v442
    %v444 = vpop.xlane.xlu0 %443
    %v445 = vsel %vm276, %v76, 0.0
    %446 = vadd.xlane.f32.xlu0 %v445
    %v447 = vpop.xlane.xlu0 %446
    %v448 = vsel %vm276, %v77, 0.0
    %449 = vadd.xlane.f32.xlu0 %v448
    %v450 = vpop.xlane.xlu0 %449
    %v451 = vsel %vm276, %v78, 0.0
    %452 = vadd.xlane.f32.xlu0 %v451
    %v453 = vpop.xlane.xlu0 %452
    %v454 = vsel %vm276, %v79, 0.0
    %455 = vadd.xlane.f32.xlu0 %v454
    %v456 = vpop.xlane.xlu0 %455
    %v457 = vsel %vm276, %v80, 0.0
    %458 = vadd.xlane.f32.xlu0 %v457
    %v459 = vpop.xlane.xlu0 %458
    %v460 = vsel %vm276, %v81, 0.0
    %461 = vadd.xlane.f32.xlu0 %v460
    %v462 = vpop.xlane.xlu0 %461
    %v463 = vsel %vm276, %v82, 0.0
    %464 = vadd.xlane.f32.xlu0 %v463
    %v465 = vpop.xlane.xlu0 %464
    %v466 = vsel %vm276, %v83, 0.0
    %467 = vadd.xlane.f32.xlu0 %v466
    %v468 = vpop.xlane.xlu0 %467
    %v469 = vsel %vm276, %v84, 0.0
    %470 = vadd.xlane.f32.xlu0 %v469
    %v471 = vpop.xlane.xlu0 %470
    %v472 = vsel %vm276, %v85, 0.0
    %473 = vadd.xlane.f32.xlu0 %v472
    %v474 = vpop.xlane.xlu0 %473
    %v475 = vsel %vm276, %v86, 0.0
    %476 = vadd.xlane.f32.xlu0 %v475
    %v477 = vpop.xlane.xlu0 %476
    %v478 = vsel %vm276, %v87, 0.0
    %479 = vadd.xlane.f32.xlu0 %v478
    %v480 = vpop.xlane.xlu0 %479
    %v481 = vsel %vm276, %v88, 0.0
    %482 = vadd.xlane.f32.xlu0 %v481
    %v483 = vpop.xlane.xlu0 %482
    %v484 = vsel %vm276, %v89, 0.0
    %485 = vadd.xlane.f32.xlu0 %v484
    %v486 = vpop.xlane.xlu0 %485
    %v487 = vsel %vm276, %v90, 0.0
    %488 = vadd.xlane.f32.xlu0 %v487
    %v489 = vpop.xlane.xlu0 %488
    %v490 = vsel %vm276, %v91, 0.0
    %491 = vadd.xlane.f32.xlu0 %v490
    %v492 = vpop.xlane.xlu0 %491
    %v493 = vsel %vm276, %v92, 0.0
    %494 = vadd.xlane.f32.xlu0 %v493
    %v495 = vpop.xlane.xlu0 %494
    %v496 = vsel %vm276, %v93, 0.0
    %497 = vadd.xlane.f32.xlu0 %v496
    %v498 = vpop.xlane.xlu0 %497
    %v499 = vsel %vm276, %v94, 0.0
    %500 = vadd.xlane.f32.xlu0 %v499
    %v501 = vpop.xlane.xlu0 %500
    %v502 = vsel %vm276, %v95, 0.0
    %503 = vadd.xlane.f32.xlu0 %v502
    %v504 = vpop.xlane.xlu0 %503
    %v505 = vsel %vm276, %v96, 0.0
    %506 = vadd.xlane.f32.xlu0 %v505
    %v507 = vpop.xlane.xlu0 %506
    %v508 = vsel %vm276, %v97, 0.0
    %509 = vadd.xlane.f32.xlu0 %v508
    %v510 = vpop.xlane.xlu0 %509
    %v511 = vsel %vm276, %v98, 0.0
    %512 = vadd.xlane.f32.xlu0 %v511
    %v513 = vpop.xlane.xlu0 %512
    %v514 = vsel %vm276, %v99, 0.0
    %515 = vadd.xlane.f32.xlu0 %v514
    %v516 = vpop.xlane.xlu0 %515
    %v517 = vsel %vm276, %v100, 0.0
    %518 = vadd.xlane.f32.xlu0 %v517
    %v519 = vpop.xlane.xlu0 %518
    %v520 = vsel %vm276, %v101, 0.0
    %521 = vadd.xlane.f32.xlu0 %v520
    %v522 = vpop.xlane.xlu0 %521
    %v523 = vsel %vm276, %v102, 0.0
    %524 = vadd.xlane.f32.xlu0 %v523
    %v525 = vpop.xlane.xlu0 %524
    %v526 = vsel %vm276, %v103, 0.0
    %527 = vadd.xlane.f32.xlu0 %v526
    %v528 = vpop.xlane.xlu0 %527
    %v529 = vsel %vm276, %v104, 0.0
    %530 = vadd.xlane.f32.xlu0 %v529
    %v531 = vpop.xlane.xlu0 %530
    %v532 = vsel %vm276, %v105, 0.0
    %533 = vadd.xlane.f32.xlu0 %v532
    %v534 = vpop.xlane.xlu0 %533
    %v535 = vsel %vm276, %v106, 0.0
    %536 = vadd.xlane.f32.xlu0 %v535
    %v537 = vpop.xlane.xlu0 %536
    %v538 = vsel %vm276, %v107, 0.0
    %539 = vadd.xlane.f32.xlu0 %v538
    %v540 = vpop.xlane.xlu0 %539
    %v541 = vsel %vm276, %v108, 0.0
    %542 = vadd.xlane.f32.xlu0 %v541
    %v543 = vpop.xlane.xlu0 %542
    %v544 = vsel %vm276, %v109, 0.0
    %545 = vadd.xlane.f32.xlu0 %v544
    %v546 = vpop.xlane.xlu0 %545
    %v547 = vsel %vm276, %v110, 0.0
    %548 = vadd.xlane.f32.xlu0 %v547
    %v549 = vpop.xlane.xlu0 %548
    %v550 = vsel %vm276, %v111, 0.0
    %551 = vadd.xlane.f32.xlu0 %v550
    %v552 = vpop.xlane.xlu0 %551
    %v553 = vsel %vm276, %v112, 0.0
    %554 = vadd.xlane.f32.xlu0 %v553
    %v555 = vpop.xlane.xlu0 %554
    %v556 = vsel %vm276, %v113, 0.0
    %557 = vadd.xlane.f32.xlu0 %v556
    %v558 = vpop.xlane.xlu0 %557
    %v559 = vsel %vm276, %v114, 0.0
    %560 = vadd.xlane.f32.xlu0 %v559
    %v561 = vpop.xlane.xlu0 %560
    %v562 = vsel %vm276, %v115, 0.0
    %563 = vadd.xlane.f32.xlu0 %v562
    %v564 = vpop.xlane.xlu0 %563
    %v565 = vsel %vm276, %v116, 0.0
    %566 = vadd.xlane.f32.xlu0 %v565
    %v567 = vpop.xlane.xlu0 %566
    %v568 = vsel %vm276, %v117, 0.0
    %569 = vadd.xlane.f32.xlu0 %v568
    %v570 = vpop.xlane.xlu0 %569
    %v571 = vsel %vm276, %v118, 0.0
    %572 = vadd.xlane.f32.xlu0 %v571
    %v573 = vpop.xlane.xlu0 %572
    %v574 = vsel %vm276, %v119, 0.0
    %575 = vadd.xlane.f32.xlu0 %v574
    %v576 = vpop.xlane.xlu0 %575
    %v577 = vsel %vm276, %v120, 0.0
    %578 = vadd.xlane.f32.xlu0 %v577
    %v579 = vpop.xlane.xlu0 %578
    %v580 = vsel %vm276, %v121, 0.0
    %581 = vadd.xlane.f32.xlu0 %v580
    %v582 = vpop.xlane.xlu0 %581
    %v583 = vsel %vm276, %v122, 0.0
    %584 = vadd.xlane.f32.xlu0 %v583
    %v585 = vpop.xlane.xlu0 %584
    %v586 = vsel %vm276, %v123, 0.0
    %587 = vadd.xlane.f32.xlu0 %v586
    %v588 = vpop.xlane.xlu0 %587
    %v589 = vsel %vm276, %v124, 0.0
    %590 = vadd.xlane.f32.xlu0 %v589
    %v591 = vpop.xlane.xlu0 %590
    %v592 = vsel %vm276, %v125, 0.0
    %593 = vadd.xlane.f32.xlu0 %v592
    %v594 = vpop.xlane.xlu0 %593
    %v595 = vsel %vm276, %v126, 0.0
    %596 = vadd.xlane.f32.xlu0 %v595
    %v597 = vpop.xlane.xlu0 %596
    %v598 = vsel %vm276, %v127, 0.0
    %599 = vadd.xlane.f32.xlu0 %v598
    %v600 = vpop.xlane.xlu0 %599
    %v601 = vsel %vm276, %v128, 0.0
    %602 = vadd.xlane.f32.xlu0 %v601
    %v603 = vpop.xlane.xlu0 %602
    %v604 = vsel %vm276, %v129, 0.0
    %605 = vadd.xlane.f32.xlu0 %v604
    %v606 = vpop.xlane.xlu0 %605
    %v607 = vsel %vm276, %v130, 0.0
    %608 = vadd.xlane.f32.xlu0 %v607
    %v609 = vpop.xlane.xlu0 %608
    %v610 = vsel %vm276, %v131, 0.0
    %611 = vadd.xlane.f32.xlu0 %v610
    %v612 = vpop.xlane.xlu0 %611
    %v613 = vsel %vm276, %v132, 0.0
    %614 = vadd.xlane.f32.xlu0 %v613
    %v615 = vpop.xlane.xlu0 %614
    %v616 = vsel %vm276, %v133, 0.0
    %617 = vadd.xlane.f32.xlu0 %v616
    %v618 = vpop.xlane.xlu0 %617
    %v619 = vsel %vm276, %v134, 0.0
    %620 = vadd.xlane.f32.xlu0 %v619
    %v621 = vpop.xlane.xlu0 %620
    %v622 = vsel %vm276, %v135, 0.0
    %623 = vadd.xlane.f32.xlu0 %v622
    %v624 = vpop.xlane.xlu0 %623
    %v625 = vsel %vm276, %v136, 0.0
    %626 = vadd.xlane.f32.xlu0 %v625
    %v627 = vpop.xlane.xlu0 %626
    %v628 = vsel %vm276, %v137, 0.0
    %629 = vadd.xlane.f32.xlu0 %v628
    %v630 = vpop.xlane.xlu0 %629
    %v631 = vsel %vm276, %v138, 0.0
    %632 = vadd.xlane.f32.xlu0 %v631
    %v633 = vpop.xlane.xlu0 %632
    %v634 = vsel %vm276, %v139, 0.0
    %635 = vadd.xlane.f32.xlu0 %v634
    %v636 = vpop.xlane.xlu0 %635
    %v637 = vsel %vm276, %v140, 0.0
    %638 = vadd.xlane.f32.xlu0 %v637
    %v639 = vpop.xlane.xlu0 %638
    %v640 = vsel %vm276, %v141, 0.0
    %641 = vadd.xlane.f32.xlu0 %v640
    %v642 = vpop.xlane.xlu0 %641
    %v643 = vsel %vm276, %v142, 0.0
    %644 = vadd.xlane.f32.xlu0 %v643
    %v645 = vpop.xlane.xlu0 %644
    %v646 = vsel %vm276, %v143, 0.0
    %647 = vadd.xlane.f32.xlu0 %v646
    %v648 = vpop.xlane.xlu0 %647
    %v649 = vsel %vm276, %v144, 0.0
    %650 = vadd.xlane.f32.xlu0 %v649
    %v651 = vpop.xlane.xlu0 %650
    %v652 = vsel %vm276, %v145, 0.0
    %653 = vadd.xlane.f32.xlu0 %v652
    %v654 = vpop.xlane.xlu0 %653
    %v655 = vsel %vm276, %v146, 0.0
    %656 = vadd.xlane.f32.xlu0 %v655
    %v657 = vpop.xlane.xlu0 %656
    %v658 = vsel %vm276, %v147, 0.0
    %659 = vadd.xlane.f32.xlu0 %v658
    %v660 = vpop.xlane.xlu0 %659
    %v661 = vsel %vm276, %v148, 0.0
    %662 = vadd.xlane.f32.xlu0 %v661
    %v663 = vpop.xlane.xlu0 %662
    %v664 = vsel %vm276, %v149, 0.0
    %665 = vadd.xlane.f32.xlu0 %v664
    %v666 = vpop.xlane.xlu0 %665
    %v667 = vsel %vm276, %v150, 0.0
    %668 = vadd.xlane.f32.xlu0 %v667
    %v669 = vpop.xlane.xlu0 %668
    %v670 = vsel %vm276, %v151, 0.0
    %671 = vadd.xlane.f32.xlu0 %v670
    %v672 = vpop.xlane.xlu0 %671
    %v673 = vsel %vm276, %v152, 0.0
    %674 = vadd.xlane.f32.xlu0 %v673
    %v675 = vpop.xlane.xlu0 %674
    %v676 = vsel %vm276, %v153, 0.0
    %677 = vadd.xlane.f32.xlu0 %v676
    %v678 = vpop.xlane.xlu0 %677
    %v679 = vsel %vm276, %v154, 0.0
    %680 = vadd.xlane.f32.xlu0 %v679
    %v681 = vpop.xlane.xlu0 %680
    %v682 = vsel %vm276, %v155, 0.0
    %683 = vadd.xlane.f32.xlu0 %v682
    %v684 = vpop.xlane.xlu0 %683
    %v685 = vsel %vm276, %v156, 0.0
    %686 = vadd.xlane.f32.xlu0 %v685
    %v687 = vpop.xlane.xlu0 %686
    %v688 = vsel %vm276, %v157, 0.0
    %689 = vadd.xlane.f32.xlu0 %v688
    %v690 = vpop.xlane.xlu0 %689
    %v691 = vsel %vm276, %v158, 0.0
    %692 = vadd.xlane.f32.xlu0 %v691
    %v693 = vpop.xlane.xlu0 %692
    %v694 = vsel %vm276, %v159, 0.0
    %695 = vadd.xlane.f32.xlu0 %v694
    %v696 = vpop.xlane.xlu0 %695
    %v697 = vsel %vm276, %v160, 0.0
    %698 = vadd.xlane.f32.xlu0 %v697
    %v699 = vpop.xlane.xlu0 %698
    %v700 = vsel %vm276, %v161, 0.0
    %701 = vadd.xlane.f32.xlu0 %v700
    %v702 = vpop.xlane.xlu0 %701
    %v703 = vsel %vm276, %v162, 0.0
    %704 = vadd.xlane.f32.xlu0 %v703
    %v705 = vpop.xlane.xlu0 %704
    %v706 = vsel %vm276, %v163, 0.0
    %707 = vadd.xlane.f32.xlu0 %v706
    %v708 = vpop.xlane.xlu0 %707
    %v709 = vsel %vm276, %v164, 0.0
    %710 = vadd.xlane.f32.xlu0 %v709
    %v711 = vpop.xlane.xlu0 %710
    %v712 = vsel %vm276, %v165, 0.0
    %713 = vadd.xlane.f32.xlu0 %v712
    %v714 = vpop.xlane.xlu0 %713
    %v715 = vsel %vm276, %v166, 0.0
    %716 = vadd.xlane.f32.xlu0 %v715
    %v717 = vpop.xlane.xlu0 %716
    %v718 = vsel %vm276, %v167, 0.0
    %719 = vadd.xlane.f32.xlu0 %v718
    %v720 = vpop.xlane.xlu0 %719
    %v721 = vsel %vm276, %v168, 0.0
    %722 = vadd.xlane.f32.xlu0 %v721
    %v723 = vpop.xlane.xlu0 %722
    %v724 = vsel %vm276, %v169, 0.0
    %725 = vadd.xlane.f32.xlu0 %v724
    %v726 = vpop.xlane.xlu0 %725
    %v727 = vsel %vm276, %v170, 0.0
    %728 = vadd.xlane.f32.xlu0 %v727
    %v729 = vpop.xlane.xlu0 %728
    %v730 = vsel %vm276, %v171, 0.0
    %731 = vadd.xlane.f32.xlu0 %v730
    %v732 = vpop.xlane.xlu0 %731
    %v733 = vsel %vm276, %v172, 0.0
    %734 = vadd.xlane.f32.xlu0 %v733
    %v735 = vpop.xlane.xlu0 %734
    %v736 = vsel %vm276, %v173, 0.0
    %737 = vadd.xlane.f32.xlu0 %v736
    %v738 = vpop.xlane.xlu0 %737
    %v739 = vsel %vm276, %v174, 0.0
    %740 = vadd.xlane.f32.xlu0 %v739
    %v741 = vpop.xlane.xlu0 %740
    %v742 = vsel %vm276, %v175, 0.0
    %743 = vadd.xlane.f32.xlu0 %v742
    %v744 = vpop.xlane.xlu0 %743
    %v745 = vsel %vm276, %v176, 0.0
    %746 = vadd.xlane.f32.xlu0 %v745
    %v747 = vpop.xlane.xlu0 %746
    %v748 = vsel %vm276, %v177, 0.0
    %749 = vadd.xlane.f32.xlu0 %v748
    %v750 = vpop.xlane.xlu0 %749
    %v751 = vsel %vm276, %v178, 0.0
    %752 = vadd.xlane.f32.xlu0 %v751
    %v753 = vpop.xlane.xlu0 %752
    %v754 = vsel %vm276, %v179, 0.0
    %755 = vadd.xlane.f32.xlu0 %v754
    %v756 = vpop.xlane.xlu0 %755
    %v757 = vsel %vm276, %v180, 0.0
    %758 = vadd.xlane.f32.xlu0 %v757
    %v759 = vpop.xlane.xlu0 %758
    %v760 = vsel %vm276, %v181, 0.0
    %761 = vadd.xlane.f32.xlu0 %v760
    %v762 = vpop.xlane.xlu0 %761
    %v763 = vsel %vm276, %v182, 0.0
    %764 = vadd.xlane.f32.xlu0 %v763
    %v765 = vpop.xlane.xlu0 %764
    %v766 = vsel %vm276, %v183, 0.0
    %767 = vadd.xlane.f32.xlu0 %v766
    %v768 = vpop.xlane.xlu0 %767
    %v769 = vsel %vm276, %v184, 0.0
    %770 = vadd.xlane.f32.xlu0 %v769
    %v771 = vpop.xlane.xlu0 %770
    %v772 = vsel %vm276, %v185, 0.0
    %773 = vadd.xlane.f32.xlu0 %v772
    %v774 = vpop.xlane.xlu0 %773
    %v775 = vsel %vm276, %v186, 0.0
    %776 = vadd.xlane.f32.xlu0 %v775
    %v777 = vpop.xlane.xlu0 %776
    %v778 = vsel %vm276, %v187, 0.0
    %779 = vadd.xlane.f32.xlu0 %v778
    %v780 = vpop.xlane.xlu0 %779
    %v781 = vsel %vm276, %v188, 0.0
    %782 = vadd.xlane.f32.xlu0 %v781
    %v783 = vpop.xlane.xlu0 %782
    %v784 = vsel %vm276, %v189, 0.0
    %785 = vadd.xlane.f32.xlu0 %v784
    %v786 = vpop.xlane.xlu0 %785
    %v787 = vsel %vm276, %v190, 0.0
    %788 = vadd.xlane.f32.xlu0 %v787
    %v789 = vpop.xlane.xlu0 %788
    %v790 = vsel %vm276, %v191, 0.0
    %791 = vadd.xlane.f32.xlu0 %v790
    %v792 = vpop.xlane.xlu0 %791
    %v793 = vsel %vm276, %v192, 0.0
    %794 = vadd.xlane.f32.xlu0 %v793
    %v795 = vpop.xlane.xlu0 %794
    %v796 = vsel %vm276, %v193, 0.0
    %797 = vadd.xlane.f32.xlu0 %v796
    %v798 = vpop.xlane.xlu0 %797
    %v799 = vsel %vm276, %v194, 0.0
    %800 = vadd.xlane.f32.xlu0 %v799
    %v801 = vpop.xlane.xlu0 %800
    %v802 = vsel %vm276, %v195, 0.0
    %803 = vadd.xlane.f32.xlu0 %v802
    %v804 = vpop.xlane.xlu0 %803
    %v805 = vsel %vm276, %v196, 0.0
    %806 = vadd.xlane.f32.xlu0 %v805
    %v807 = vpop.xlane.xlu0 %806
    %v808 = vsel %vm276, %v197, 0.0
    %809 = vadd.xlane.f32.xlu0 %v808
    %v810 = vpop.xlane.xlu0 %809
    %v811 = vsel %vm276, %v198, 0.0
    %812 = vadd.xlane.f32.xlu0 %v811
    %v813 = vpop.xlane.xlu0 %812
    %v814 = vsel %vm276, %v199, 0.0
    %815 = vadd.xlane.f32.xlu0 %v814
    %v816 = vpop.xlane.xlu0 %815
    %v817 = vsel %vm276, %v200, 0.0
    %818 = vadd.xlane.f32.xlu0 %v817
    %v819 = vpop.xlane.xlu0 %818
    %v820 = vsel %vm276, %v201, 0.0
    %821 = vadd.xlane.f32.xlu0 %v820
    %v822 = vpop.xlane.xlu0 %821
    %v823 = vsel %vm276, %v202, 0.0
    %824 = vadd.xlane.f32.xlu0 %v823
    %v825 = vpop.xlane.xlu0 %824
    %v826 = vsel %vm276, %v203, 0.0
    %827 = vadd.xlane.f32.xlu0 %v826
    %v828 = vpop.xlane.xlu0 %827
    %v829 = vsel %vm276, %v204, 0.0
    %830 = vadd.xlane.f32.xlu0 %v829
    %v831 = vpop.xlane.xlu0 %830
    %v832 = vsel %vm276, %v205, 0.0
    %833 = vadd.xlane.f32.xlu0 %v832
    %v834 = vpop.xlane.xlu0 %833
    %v835 = vsel %vm276, %v206, 0.0
    %836 = vadd.xlane.f32.xlu0 %v835
    %v837 = vpop.xlane.xlu0 %836
    %v838 = vsel %vm276, %v207, 0.0
    %839 = vadd.xlane.f32.xlu0 %v838
    %v840 = vpop.xlane.xlu0 %839
    %v841 = vsel %vm276, %v208, 0.0
    %842 = vadd.xlane.f32.xlu0 %v841
    %v843 = vpop.xlane.xlu0 %842
    %v844 = vsel %vm276, %v209, 0.0
    %845 = vadd.xlane.f32.xlu0 %v844
    %v846 = vpop.xlane.xlu0 %845
    %v847 = vsel %vm276, %v210, 0.0
    %848 = vadd.xlane.f32.xlu0 %v847
    %v849 = vpop.xlane.xlu0 %848
    %v850 = vsel %vm276, %v211, 0.0
    %851 = vadd.xlane.f32.xlu0 %v850
    %v852 = vpop.xlane.xlu0 %851
    %v853 = vsel %vm276, %v212, 0.0
    %854 = vadd.xlane.f32.xlu0 %v853
    %v855 = vpop.xlane.xlu0 %854
    %v856 = vsel %vm276, %v213, 0.0
    %857 = vadd.xlane.f32.xlu0 %v856
    %v858 = vpop.xlane.xlu0 %857
    %v859 = vsel %vm276, %v214, 0.0
    %860 = vadd.xlane.f32.xlu0 %v859
    %v861 = vpop.xlane.xlu0 %860
    %v862 = vsel %vm276, %v215, 0.0
    %863 = vadd.xlane.f32.xlu0 %v862
    %v864 = vpop.xlane.xlu0 %863
    %v865 = vsel %vm276, %v216, 0.0
    %866 = vadd.xlane.f32.xlu0 %v865
    %v867 = vpop.xlane.xlu0 %866
    %v868 = vsel %vm276, %v217, 0.0
    %869 = vadd.xlane.f32.xlu0 %v868
    %v870 = vpop.xlane.xlu0 %869
    %v871 = vsel %vm276, %v218, 0.0
    %872 = vadd.xlane.f32.xlu0 %v871
    %v873 = vpop.xlane.xlu0 %872
    %v874 = vsel %vm276, %v219, 0.0
    %875 = vadd.xlane.f32.xlu0 %v874
    %v876 = vpop.xlane.xlu0 %875
    %v877 = vsel %vm276, %v220, 0.0
    %878 = vadd.xlane.f32.xlu0 %v877
    %v879 = vpop.xlane.xlu0 %878
    %v880 = vsel %vm276, %v221, 0.0
    %881 = vadd.xlane.f32.xlu0 %v880
    %v882 = vpop.xlane.xlu0 %881
    %v883 = vsel %vm276, %v222, 0.0
    %884 = vadd.xlane.f32.xlu0 %v883
    %v885 = vpop.xlane.xlu0 %884
    %v886 = vsel %vm276, %v223, 0.0
    %887 = vadd.xlane.f32.xlu0 %v886
    %v888 = vpop.xlane.xlu0 %887
    %v889 = vsel %vm276, %v224, 0.0
    %890 = vadd.xlane.f32.xlu0 %v889
    %v891 = vpop.xlane.xlu0 %890
    %v892 = vsel %vm276, %v225, 0.0
    %893 = vadd.xlane.f32.xlu0 %v892
    %v894 = vpop.xlane.xlu0 %893
    %v895 = vsel %vm276, %v226, 0.0
    %896 = vadd.xlane.f32.xlu0 %v895
    %v897 = vpop.xlane.xlu0 %896
    %v898 = vsel %vm276, %v227, 0.0
    %899 = vadd.xlane.f32.xlu0 %v898
    %v900 = vpop.xlane.xlu0 %899
    %v901 = vsel %vm276, %v228, 0.0
    %902 = vadd.xlane.f32.xlu0 %v901
    %v903 = vpop.xlane.xlu0 %902
    %v904 = vsel %vm276, %v229, 0.0
    %905 = vadd.xlane.f32.xlu0 %v904
    %v906 = vpop.xlane.xlu0 %905
    %v907 = vsel %vm276, %v230, 0.0
    %908 = vadd.xlane.f32.xlu0 %v907
    %v909 = vpop.xlane.xlu0 %908
    %v910 = vsel %vm276, %v231, 0.0
    %911 = vadd.xlane.f32.xlu0 %v910
    %v912 = vpop.xlane.xlu0 %911
    %v913 = vsel %vm276, %v232, 0.0
    %914 = vadd.xlane.f32.xlu0 %v913
    %v915 = vpop.xlane.xlu0 %914
    %v916 = vsel %vm276, %v233, 0.0
    %917 = vadd.xlane.f32.xlu0 %v916
    %v918 = vpop.xlane.xlu0 %917
    %v919 = vsel %vm276, %v234, 0.0
    %920 = vadd.xlane.f32.xlu0 %v919
    %v921 = vpop.xlane.xlu0 %920
    %v922 = vsel %vm276, %v235, 0.0
    %923 = vadd.xlane.f32.xlu0 %v922
    %v924 = vpop.xlane.xlu0 %923
    %v925 = vsel %vm276, %v236, 0.0
    %926 = vadd.xlane.f32.xlu0 %v925
    %v927 = vpop.xlane.xlu0 %926
    %v928 = vsel %vm276, %v237, 0.0
    %929 = vadd.xlane.f32.xlu0 %v928
    %v930 = vpop.xlane.xlu0 %929
    %v931 = vsel %vm276, %v238, 0.0
    %932 = vadd.xlane.f32.xlu0 %v931
    %v933 = vpop.xlane.xlu0 %932
    %v934 = vsel %vm276, %v239, 0.0
    %935 = vadd.xlane.f32.xlu0 %v934
    %v936 = vpop.xlane.xlu0 %935
    %v937 = vsel %vm276, %v240, 0.0
    %938 = vadd.xlane.f32.xlu0 %v937
    %v939 = vpop.xlane.xlu0 %938
    %v940 = vsel %vm276, %v241, 0.0
    %941 = vadd.xlane.f32.xlu0 %v940
    %v942 = vpop.xlane.xlu0 %941
    %v943 = vsel %vm276, %v242, 0.0
    %944 = vadd.xlane.f32.xlu0 %v943
    %v945 = vpop.xlane.xlu0 %944
    %v946 = vsel %vm276, %v243, 0.0
    %947 = vadd.xlane.f32.xlu0 %v946
    %v948 = vpop.xlane.xlu0 %947
    %v949 = vsel %vm276, %v244, 0.0
    %950 = vadd.xlane.f32.xlu0 %v949
    %v951 = vpop.xlane.xlu0 %950
    %v952 = vsel %vm276, %v245, 0.0
    %953 = vadd.xlane.f32.xlu0 %v952
    %v954 = vpop.xlane.xlu0 %953
    %v955 = vsel %vm276, %v246, 0.0
    %956 = vadd.xlane.f32.xlu0 %v955
    %v957 = vpop.xlane.xlu0 %956
    %v958 = vsel %vm276, %v247, 0.0
    %959 = vadd.xlane.f32.xlu0 %v958
    %v960 = vpop.xlane.xlu0 %959
    %v961 = vsel %vm276, %v248, 0.0
    %962 = vadd.xlane.f32.xlu0 %v961
    %v963 = vpop.xlane.xlu0 %962
    %v964 = vsel %vm276, %v249, 0.0
    %965 = vadd.xlane.f32.xlu0 %v964
    %v966 = vpop.xlane.xlu0 %965
    %v967 = vsel %vm276, %v250, 0.0
    %968 = vadd.xlane.f32.xlu0 %v967
    %v969 = vpop.xlane.xlu0 %968
    %v970 = vsel %vm276, %v251, 0.0
    %971 = vadd.xlane.f32.xlu0 %v970
    %v972 = vpop.xlane.xlu0 %971
    %v973 = vsel %vm276, %v252, 0.0
    %974 = vadd.xlane.f32.xlu0 %v973
    %v975 = vpop.xlane.xlu0 %974
    %v976 = vsel %vm276, %v253, 0.0
    %977 = vadd.xlane.f32.xlu0 %v976
    %v978 = vpop.xlane.xlu0 %977
    %v979 = vsel %vm276, %v254, 0.0
    %980 = vadd.xlane.f32.xlu0 %v979
    %v981 = vpop.xlane.xlu0 %980
    %v982 = vsel %vm276, %v255, 0.0
    %983 = vadd.xlane.f32.xlu0 %v982
    %v984 = vpop.xlane.xlu0 %983
    %v985 = vsel %vm276, %v256, 0.0
    %986 = vadd.xlane.f32.xlu0 %v985
    %v987 = vpop.xlane.xlu0 %986
    %v988 = vsel %vm276, %v257, 0.0
    %989 = vadd.xlane.f32.xlu0 %v988
    %v990 = vpop.xlane.xlu0 %989
    %v991 = vsel %vm276, %v258, 0.0
    %992 = vadd.xlane.f32.xlu0 %v991
    %v993 = vpop.xlane.xlu0 %992
    %v994 = vsel %vm276, %v259, 0.0
    %995 = vadd.xlane.f32.xlu0 %v994
    %v996 = vpop.xlane.xlu0 %995
    %v997 = vsel %vm276, %v260, 0.0
    %998 = vadd.xlane.f32.xlu0 %v997
    %v999 = vpop.xlane.xlu0 %998
    %v1000 = vsel %vm276, %v261, 0.0
    %1001 = vadd.xlane.f32.xlu0 %v1000
    %v1002 = vpop.xlane.xlu0 %1001
    %v1003 = vsel %vm276, %v262, 0.0
    %1004 = vadd.xlane.f32.xlu0 %v1003
    %v1005 = vpop.xlane.xlu0 %1004
    %v1006 = vsel %vm276, %v263, 0.0
    %1007 = vadd.xlane.f32.xlu0 %v1006
    %v1008 = vpop.xlane.xlu0 %1007
    %v1009 = vsel %vm276, %v264, 0.0
    %1010 = vadd.xlane.f32.xlu0 %v1009
    %v1011 = vpop.xlane.xlu0 %1010
    %v1012 = vsel %vm276, %v265, 0.0
    %1013 = vadd.xlane.f32.xlu0 %v1012
    %v1014 = vpop.xlane.xlu0 %1013
    %v1015 = vsel %vm276, %v266, 0.0
    %1016 = vadd.xlane.f32.xlu0 %v1015
    %v1017 = vpop.xlane.xlu0 %1016
    %v1018 = vsel %vm276, %v267, 0.0
    %1019 = vadd.xlane.f32.xlu0 %v1018
    %v1020 = vpop.xlane.xlu0 %1019
    %v1021 = vsel %vm276, %v268, 0.0
    %1022 = vadd.xlane.f32.xlu0 %v1021
    %v1023 = vpop.xlane.xlu0 %1022
    %v1024 = vsel %vm276, %v269, 0.0
    %1025 = vadd.xlane.f32.xlu0 %v1024
    %v1026 = vpop.xlane.xlu0 %1025
    %v1027 = vsel %vm276, %v270, 0.0
    %1028 = vadd.xlane.f32.xlu0 %v1027
    %v1029 = vpop.xlane.xlu0 %1028
    %v1030 = vsel %vm276, %v271, 0.0
    %1031 = vadd.xlane.f32.xlu0 %v1030
    %v1032 = vpop.xlane.xlu0 %1031
    %v1033 = vsel %vm276, %v272, 0.0
    %1034 = vadd.xlane.f32.xlu0 %v1033
    %v1035 = vpop.xlane.xlu0 %1034
    %v1036 = vsel %vm276, %v273, 0.0
    %1037 = vadd.xlane.f32.xlu0 %v1036
    %v1038 = vpop.xlane.xlu0 %1037
    %v1039 = vsel %vm276, %v274, 0.0
    %1040 = vadd.xlane.f32.xlu0 %v1039
    %v1041 = vpop.xlane.xlu0 %1040
    %v1042 = vsel %vm276, %v275, 0.0
    %1043 = vadd.xlane.f32.xlu0 %v1042
    %v1044 = vpop.xlane.xlu0 %1043
    %v1045 = vld [vmem:[#allocation2] sm:$0x3]
    %v1046 = vld [vmem:[%s1] sm:$0xff]
    %v1047 = vld [vmem:[%s1 + $0x8] sm:$0xff]
    %v1048 = vld [vmem:[%s1 + $0x10] sm:$0xff]
    %v1049 = vld [vmem:[%s1 + $0x18] sm:$0xff]
    %v1050 = vld [vmem:[%s1 + $0x20] sm:$0xff]
    %v1051 = vld [vmem:[%s1 + $0x28] sm:$0xff]
    %v1052 = vld [vmem:[%s1 + $0x30] sm:$0xff]
    %v1053 = vld [vmem:[%s1 + $0x38] sm:$0xff]
    %v1054 = vld [vmem:[%s1 + $0x40] sm:$0xff]
    %v1055 = vld [vmem:[%s1 + $0x48] sm:$0xff]
    %v1056 = vld [vmem:[%s1 + $0x50] sm:$0xff]
    %v1057 = vld [vmem:[%s1 + $0x58] sm:$0xff]
    %v1058 = vld [vmem:[%s1 + $0x60] sm:$0xff]
    %v1059 = vld [vmem:[%s1 + $0x68] sm:$0xff]
    %v1060 = vld [vmem:[%s1 + $0x70] sm:$0xff]
    %v1061 = vld [vmem:[%s1 + $0x78] sm:$0xff]
    %v1062 = vld [vmem:[%s1 + $0x80] sm:$0xff]
    %v1063 = vld [vmem:[%s1 + $0x88] sm:$0xff]
    %v1064 = vld [vmem:[%s1 + $0x90] sm:$0xff]
    %v1065 = vld [vmem:[%s1 + $0x98] sm:$0xff]
    %v1066 = vld [vmem:[%s1 + $0xa0] sm:$0xff]
    %v1067 = vld [vmem:[%s1 + $0xa8] sm:$0xff]
    %v1068 = vld [vmem:[%s1 + $0xb0] sm:$0xff]
    %v1069 = vld [vmem:[%s1 + $0xb8] sm:$0xff]
    %v1070 = vld [vmem:[%s1 + $0xc0] sm:$0xff]
    %v1071 = vld [vmem:[%s1 + $0xc8] sm:$0xff]
    %v1072 = vld [vmem:[%s1 + $0xd0] sm:$0xff]
    %v1073 = vld [vmem:[%s1 + $0xd8] sm:$0xff]
    %v1074 = vld [vmem:[%s1 + $0xe0] sm:$0xff]
    %v1075 = vld [vmem:[%s1 + $0xe8] sm:$0xff]
    %v1076 = vld [vmem:[%s1 + $0xf0] sm:$0xff]
    %v1077 = vld [vmem:[%s1 + $0xf8] sm:$0xff]
    %v1078 = vld [vmem:[%s1 + $0x100] sm:$0xff]
    %v1079 = vld [vmem:[%s1 + $0x108] sm:$0xff]
    %v1080 = vld [vmem:[%s1 + $0x110] sm:$0xff]
    %v1081 = vld [vmem:[%s1 + $0x118] sm:$0xff]
    %v1082 = vld [vmem:[%s1 + $0x120] sm:$0xff]
    %v1083 = vld [vmem:[%s1 + $0x128] sm:$0xff]
    %v1084 = vld [vmem:[%s1 + $0x130] sm:$0xff]
    %v1085 = vld [vmem:[%s1 + $0x138] sm:$0xff]
    %v1086 = vld [vmem:[%s1 + $0x140] sm:$0xff]
    %v1087 = vld [vmem:[%s1 + $0x148] sm:$0xff]
    %v1088 = vld [vmem:[%s1 + $0x150] sm:$0xff]
    %v1089 = vld [vmem:[%s1 + $0x158] sm:$0xff]
    %v1090 = vld [vmem:[%s1 + $0x160] sm:$0xff]
    %v1091 = vld [vmem:[%s1 + $0x168] sm:$0xff]
    %v1092 = vld [vmem:[%s1 + $0x170] sm:$0xff]
    %v1093 = vld [vmem:[%s1 + $0x178] sm:$0xff]
    %v1094 = vld [vmem:[%s1 + $0x180] sm:$0xff]
    %v1095 = vld [vmem:[%s1 + $0x188] sm:$0xff]
    %v1096 = vld [vmem:[%s1 + $0x190] sm:$0xff]
    %v1097 = vld [vmem:[%s1 + $0x198] sm:$0xff]
    %v1098 = vld [vmem:[%s1 + $0x1a0] sm:$0xff]
    %v1099 = vld [vmem:[%s1 + $0x1a8] sm:$0xff]
    %v1100 = vld [vmem:[%s1 + $0x1b0] sm:$0xff]
    %v1101 = vld [vmem:[%s1 + $0x1b8] sm:$0xff]
    %v1102 = vld [vmem:[%s1 + $0x1c0] sm:$0xff]
    %v1103 = vld [vmem:[%s1 + $0x1c8] sm:$0xff]
    %v1104 = vld [vmem:[%s1 + $0x1d0] sm:$0xff]
    %v1105 = vld [vmem:[%s1 + $0x1d8] sm:$0xff]
    %v1106 = vld [vmem:[%s1 + $0x1e0] sm:$0xff]
    %v1107 = vld [vmem:[%s1 + $0x1e8] sm:$0xff]
    %v1108 = vld [vmem:[%s1 + $0x1f0] sm:$0xff]
    %v1109 = vld [vmem:[%s1 + $0x1f8] sm:$0xff]
    %v1110 = vld [vmem:[%s1 + $0x200] sm:$0xff]
    %v1111 = vld [vmem:[%s1 + $0x208] sm:$0xff]
    %v1112 = vld [vmem:[%s1 + $0x210] sm:$0xff]
    %v1113 = vld [vmem:[%s1 + $0x218] sm:$0xff]
    %v1114 = vld [vmem:[%s1 + $0x220] sm:$0xff]
    %v1115 = vld [vmem:[%s1 + $0x228] sm:$0xff]
    %v1116 = vld [vmem:[%s1 + $0x230] sm:$0xff]
    %v1117 = vld [vmem:[%s1 + $0x238] sm:$0xff]
    %v1118 = vld [vmem:[%s1 + $0x240] sm:$0xff]
    %v1119 = vld [vmem:[%s1 + $0x248] sm:$0xff]
    %v1120 = vld [vmem:[%s1 + $0x250] sm:$0xff]
    %v1121 = vld [vmem:[%s1 + $0x258] sm:$0xff]
    %v1122 = vld [vmem:[%s1 + $0x260] sm:$0xff]
    %v1123 = vld [vmem:[%s1 + $0x268] sm:$0xff]
    %v1124 = vld [vmem:[%s1 + $0x270] sm:$0xff]
    %v1125 = vld [vmem:[%s1 + $0x278] sm:$0xff]
    %v1126 = vld [vmem:[%s1 + $0x280] sm:$0xff]
    %v1127 = vld [vmem:[%s1 + $0x288] sm:$0xff]
    %v1128 = vld [vmem:[%s1 + $0x290] sm:$0xff]
    %v1129 = vld [vmem:[%s1 + $0x298] sm:$0xff]
    %v1130 = vld [vmem:[%s1 + $0x2a0] sm:$0xff]
    %v1131 = vld [vmem:[%s1 + $0x2a8] sm:$0xff]
    %v1132 = vld [vmem:[%s1 + $0x2b0] sm:$0xff]
    %v1133 = vld [vmem:[%s1 + $0x2b8] sm:$0xff]
    %v1134 = vld [vmem:[%s1 + $0x2c0] sm:$0xff]
    %v1135 = vld [vmem:[%s1 + $0x2c8] sm:$0xff]
    %v1136 = vld [vmem:[%s1 + $0x2d0] sm:$0xff]
    %v1137 = vld [vmem:[%s1 + $0x2d8] sm:$0xff]
    %v1138 = vld [vmem:[%s1 + $0x2e0] sm:$0xff]
    %v1139 = vld [vmem:[%s1 + $0x2e8] sm:$0xff]
    %v1140 = vld [vmem:[%s1 + $0x2f0] sm:$0xff]
    %v1141 = vld [vmem:[%s1 + $0x2f8] sm:$0xff]
    %v1142 = vld [vmem:[%s1 + $0x300] sm:$0xff]
    %v1143 = vld [vmem:[%s1 + $0x308] sm:$0xff]
    %v1144 = vld [vmem:[%s1 + $0x310] sm:$0xff]
    %v1145 = vld [vmem:[%s1 + $0x318] sm:$0xff]
    %v1146 = vld [vmem:[%s1 + $0x320] sm:$0xff]
    %v1147 = vld [vmem:[%s1 + $0x328] sm:$0xff]
    %v1148 = vld [vmem:[%s1 + $0x330] sm:$0xff]
    %v1149 = vld [vmem:[%s1 + $0x338] sm:$0xff]
    %v1150 = vld [vmem:[%s1 + $0x340] sm:$0xff]
    %v1151 = vld [vmem:[%s1 + $0x348] sm:$0xff]
    %v1152 = vld [vmem:[%s1 + $0x350] sm:$0xff]
    %v1153 = vld [vmem:[%s1 + $0x358] sm:$0xff]
    %v1154 = vld [vmem:[%s1 + $0x360] sm:$0xff]
    %v1155 = vld [vmem:[%s1 + $0x368] sm:$0xff]
    %v1156 = vld [vmem:[%s1 + $0x370] sm:$0xff]
    %v1157 = vld [vmem:[%s1 + $0x378] sm:$0xff]
    %v1158 = vld [vmem:[%s1 + $0x380] sm:$0xff]
    %v1159 = vld [vmem:[%s1 + $0x388] sm:$0xff]
    %v1160 = vld [vmem:[%s1 + $0x390] sm:$0xff]
    %v1161 = vld [vmem:[%s1 + $0x398] sm:$0xff]
    %v1162 = vld [vmem:[%s1 + $0x3a0] sm:$0xff]
    %v1163 = vld [vmem:[%s1 + $0x3a8] sm:$0xff]
    %v1164 = vld [vmem:[%s1 + $0x3b0] sm:$0xff]
    %v1165 = vld [vmem:[%s1 + $0x3b8] sm:$0xff]
    %v1166 = vld [vmem:[%s1 + $0x3c0] sm:$0xff]
    %v1167 = vld [vmem:[%s1 + $0x3c8] sm:$0xff]
    %v1168 = vld [vmem:[%s1 + $0x3d0] sm:$0xff]
    %v1169 = vld [vmem:[%s1 + $0x3d8] sm:$0xff]
    %v1170 = vld [vmem:[%s1 + $0x3e0] sm:$0xff]
    %v1171 = vld [vmem:[%s1 + $0x3e8] sm:$0xff]
    %v1172 = vld [vmem:[%s1 + $0x3f0] sm:$0xff]
    %v1173 = vld [vmem:[%s1 + $0x3f8] sm:$0xff]
    %v1430 = vlaneseq
    %v1431 = vand.u32 %v1430, 127
    %v1432 = vlaneseq
    %v1433 = vshrl.u32 %v1432, 7
    %v1434 = vsub.s32 %v1431, %v1433
    %v1435 = vrot.slane %v279, %v1434
    %v1436 = vadd.s32 %v1431, 4294967288
    %v1437 = vlaneseq
    %v1438 = vshrl.u32 %v1437, 7
    %v1439 = vsub.s32 %v1436, %v1438
    %v1440 = vrot.slane %v282, %v1439
    %vm1441 = vcmask 130112
    %v1442 = vsel %vm1441, %v1440, %v1435
    %v1443 = vadd.s32 %v1431, 4294967280
    %v1444 = vlaneseq
    %v1445 = vshrl.u32 %v1444, 7
    %v1446 = vsub.s32 %v1443, %v1445
    %v1447 = vrot.slane %v285, %v1446
    %vm1448 = vcmask 195712
    %v1449 = vsel %vm1448, %v1447, %v1442
    %v1450 = vadd.s32 %v1431, 4294967272
    %v1451 = vlaneseq
    %v1452 = vshrl.u32 %v1451, 7
    %v1453 = vsub.s32 %v1450, %v1452
    %v1454 = vrot.slane %v288, %v1453
    %vm1455 = vcmask 261312
    %v1456 = vsel %vm1455, %v1454, %v1449
    %v1457 = vadd.s32 %v1431, 4294967264
    %v1458 = vlaneseq
    %v1459 = vshrl.u32 %v1458, 7
    %v1460 = vsub.s32 %v1457, %v1459
    %v1461 = vrot.slane %v291, %v1460
    %vm1462 = vcmask 326912
    %v1463 = vsel %vm1462, %v1461, %v1456
    %v1464 = vadd.s32 %v1431, 4294967256
    %v1465 = vlaneseq
    %v1466 = vshrl.u32 %v1465, 7
    %v1467 = vsub.s32 %v1464, %v1466
    %v1468 = vrot.slane %v294, %v1467
    %vm1469 = vcmask 392512
    %v1470 = vsel %vm1469, %v1468, %v1463
    %v1471 = vadd.s32 %v1431, 4294967248
    %v1472 = vlaneseq
    %v1473 = vshrl.u32 %v1472, 7
    %v1474 = vsub.s32 %v1471, %v1473
    %v1475 = vrot.slane %v297, %v1474
    %vm1476 = vcmask 458112
    %v1477 = vsel %vm1476, %v1475, %v1470
    %v1478 = vadd.s32 %v1431, 4294967240
    %v1479 = vlaneseq
    %v1480 = vshrl.u32 %v1479, 7
    %v1481 = vsub.s32 %v1478, %v1480
    %v1482 = vrot.slane %v300, %v1481
    %vm1483 = vcmask 523712
    %v1484 = vsel %vm1483, %v1482, %v1477
    %v1485 = vadd.s32 %v1431, 4294967232
    %v1486 = vlaneseq
    %v1487 = vshrl.u32 %v1486, 7
    %v1488 = vsub.s32 %v1485, %v1487
    %v1489 = vrot.slane %v303, %v1488
    %vm1490 = vcmask 589312
    %v1491 = vsel %vm1490, %v1489, %v1484
    %v1492 = vadd.s32 %v1431, 4294967224
    %v1493 = vlaneseq
    %v1494 = vshrl.u32 %v1493, 7
    %v1495 = vsub.s32 %v1492, %v1494
    %v1496 = vrot.slane %v306, %v1495
    %vm1497 = vcmask 654912
    %v1498 = vsel %vm1497, %v1496, %v1491
    %v1499 = vadd.s32 %v1431, 4294967216
    %v1500 = vlaneseq
    %v1501 = vshrl.u32 %v1500, 7
    %v1502 = vsub.s32 %v1499, %v1501
    %v1503 = vrot.slane %v309, %v1502
    %vm1504 = vcmask 720512
    %v1505 = vsel %vm1504, %v1503, %v1498
    %v1506 = vadd.s32 %v1431, 4294967208
    %v1507 = vlaneseq
    %v1508 = vshrl.u32 %v1507, 7
    %v1509 = vsub.s32 %v1506, %v1508
    %v1510 = vrot.slane %v312, %v1509
    %vm1511 = vcmask 786112
    %v1512 = vsel %vm1511, %v1510, %v1505
    %v1513 = vadd.s32 %v1431, 4294967200
    %v1514 = vlaneseq
    %v1515 = vshrl.u32 %v1514, 7
    %v1516 = vsub.s32 %v1513, %v1515
    %v1517 = vrot.slane %v315, %v1516
    %vm1518 = vcmask 851712
    %v1519 = vsel %vm1518, %v1517, %v1512
    %v1520 = vadd.s32 %v1431, 4294967192
    %v1521 = vlaneseq
    %v1522 = vshrl.u32 %v1521, 7
    %v1523 = vsub.s32 %v1520, %v1522
    %v1524 = vrot.slane %v318, %v1523
    %vm1525 = vcmask 917312
    %v1526 = vsel %vm1525, %v1524, %v1519
    %v1527 = vadd.s32 %v1431, 4294967184
    %v1528 = vlaneseq
    %v1529 = vshrl.u32 %v1528, 7
    %v1530 = vsub.s32 %v1527, %v1529
    %v1531 = vrot.slane %v321, %v1530
    %vm1532 = vcmask 982912
    %v1533 = vsel %vm1532, %v1531, %v1526
    %v1534 = vadd.s32 %v1431, 4294967176
    %v1535 = vlaneseq
    %v1536 = vshrl.u32 %v1535, 7
    %v1537 = vsub.s32 %v1534, %v1536
    %v1538 = vrot.slane %v324, %v1537
    %vm1539 = vcmask 1048512
    %v1540 = vsel %vm1539, %v1538, %v1533
    %v1541 = vlaneseq
    %v1542 = vshrl.u32 %v1541, 7
    %v1543 = vsub.s32 %v1431, %v1542
    %v1544 = vrot.slane %v327, %v1543
    %v1545 = vlaneseq
    %v1546 = vshrl.u32 %v1545, 7
    %v1547 = vsub.s32 %v1436, %v1546
    %v1548 = vrot.slane %v330, %v1547
    %v1549 = vsel %vm1441, %v1548, %v1544
    %v1550 = vlaneseq
    %v1551 = vshrl.u32 %v1550, 7
    %v1552 = vsub.s32 %v1443, %v1551
    %v1553 = vrot.slane %v333, %v1552
    %v1554 = vsel %vm1448, %v1553, %v1549
    %v1555 = vlaneseq
    %v1556 = vshrl.u32 %v1555, 7
    %v1557 = vsub.s32 %v1450, %v1556
    %v1558 = vrot.slane %v336, %v1557
    %v1559 = vsel %vm1455, %v1558, %v1554
    %v1560 = vlaneseq
    %v1561 = vshrl.u32 %v1560, 7
    %v1562 = vsub.s32 %v1457, %v1561
    %v1563 = vrot.slane %v339, %v1562
    %v1564 = vsel %vm1462, %v1563, %v1559
    %v1565 = vlaneseq
    %v1566 = vshrl.u32 %v1565, 7
    %v1567 = vsub.s32 %v1464, %v1566
    %v1568 = vrot.slane %v342, %v1567
    %v1569 = vsel %vm1469, %v1568, %v1564
    %v1570 = vlaneseq
    %v1571 = vshrl.u32 %v1570, 7
    %v1572 = vsub.s32 %v1471, %v1571
    %v1573 = vrot.slane %v345, %v1572
    %v1574 = vsel %vm1476, %v1573, %v1569
    %v1575 = vlaneseq
    %v1576 = vshrl.u32 %v1575, 7
    %v1577 = vsub.s32 %v1478, %v1576
    %v1578 = vrot.slane %v348, %v1577
    %v1579 = vsel %vm1483, %v1578, %v1574
    %v1580 = vlaneseq
    %v1581 = vshrl.u32 %v1580, 7
    %v1582 = vsub.s32 %v1485, %v1581
    %v1583 = vrot.slane %v351, %v1582
    %v1584 = vsel %vm1490, %v1583, %v1579
    %v1585 = vlaneseq
    %v1586 = vshrl.u32 %v1585, 7
    %v1587 = vsub.s32 %v1492, %v1586
    %v1588 = vrot.slane %v354, %v1587
    %v1589 = vsel %vm1497, %v1588, %v1584
    %v1590 = vlaneseq
    %v1591 = vshrl.u32 %v1590, 7
    %v1592 = vsub.s32 %v1499, %v1591
    %v1593 = vrot.slane %v357, %v1592
    %v1594 = vsel %vm1504, %v1593, %v1589
    %v1595 = vlaneseq
    %v1596 = vshrl.u32 %v1595, 7
    %v1597 = vsub.s32 %v1506, %v1596
    %v1598 = vrot.slane %v360, %v1597
    %v1599 = vsel %vm1511, %v1598, %v1594
    %v1600 = vlaneseq
    %v1601 = vshrl.u32 %v1600, 7
    %v1602 = vsub.s32 %v1513, %v1601
    %v1603 = vrot.slane %v363, %v1602
    %v1604 = vsel %vm1518, %v1603, %v1599
    %v1605 = vlaneseq
    %v1606 = vshrl.u32 %v1605, 7
    %v1607 = vsub.s32 %v1520, %v1606
    %v1608 = vrot.slane %v366, %v1607
    %v1609 = vsel %vm1525, %v1608, %v1604
    %v1610 = vlaneseq
    %v1611 = vshrl.u32 %v1610, 7
    %v1612 = vsub.s32 %v1527, %v1611
    %v1613 = vrot.slane %v369, %v1612
    %v1614 = vsel %vm1532, %v1613, %v1609
    %v1615 = vlaneseq
    %v1616 = vshrl.u32 %v1615, 7
    %v1617 = vsub.s32 %v1534, %v1616
    %v1618 = vrot.slane %v372, %v1617
    %v1619 = vsel %vm1539, %v1618, %v1614
    %v1620 = vlaneseq
    %v1621 = vshrl.u32 %v1620, 7
    %v1622 = vsub.s32 %v1431, %v1621
    %v1623 = vrot.slane %v375, %v1622
    %v1624 = vlaneseq
    %v1625 = vshrl.u32 %v1624, 7
    %v1626 = vsub.s32 %v1436, %v1625
    %v1627 = vrot.slane %v378, %v1626
    %v1628 = vsel %vm1441, %v1627, %v1623
    %v1629 = vlaneseq
    %v1630 = vshrl.u32 %v1629, 7
    %v1631 = vsub.s32 %v1443, %v1630
    %v1632 = vrot.slane %v381, %v1631
    %v1633 = vsel %vm1448, %v1632, %v1628
    %v1634 = vlaneseq
    %v1635 = vshrl.u32 %v1634, 7
    %v1636 = vsub.s32 %v1450, %v1635
    %v1637 = vrot.slane %v384, %v1636
    %v1638 = vsel %vm1455, %v1637, %v1633
    %v1639 = vlaneseq
    %v1640 = vshrl.u32 %v1639, 7
    %v1641 = vsub.s32 %v1457, %v1640
    %v1642 = vrot.slane %v387, %v1641
    %v1643 = vsel %vm1462, %v1642, %v1638
    %v1644 = vlaneseq
    %v1645 = vshrl.u32 %v1644, 7
    %v1646 = vsub.s32 %v1464, %v1645
    %v1647 = vrot.slane %v390, %v1646
    %v1648 = vsel %vm1469, %v1647, %v1643
    %v1649 = vlaneseq
    %v1650 = vshrl.u32 %v1649, 7
    %v1651 = vsub.s32 %v1471, %v1650
    %v1652 = vrot.slane %v393, %v1651
    %v1653 = vsel %vm1476, %v1652, %v1648
    %v1654 = vlaneseq
    %v1655 = vshrl.u32 %v1654, 7
    %v1656 = vsub.s32 %v1478, %v1655
    %v1657 = vrot.slane %v396, %v1656
    %v1658 = vsel %vm1483, %v1657, %v1653
    %v1659 = vlaneseq
    %v1660 = vshrl.u32 %v1659, 7
    %v1661 = vsub.s32 %v1485, %v1660
    %v1662 = vrot.slane %v399, %v1661
    %v1663 = vsel %vm1490, %v1662, %v1658
    %v1664 = vlaneseq
    %v1665 = vshrl.u32 %v1664, 7
    %v1666 = vsub.s32 %v1492, %v1665
    %v1667 = vrot.slane %v402, %v1666
    %v1668 = vsel %vm1497, %v1667, %v1663
    %v1669 = vlaneseq
    %v1670 = vshrl.u32 %v1669, 7
    %v1671 = vsub.s32 %v1499, %v1670
    %v1672 = vrot.slane %v405, %v1671
    %v1673 = vsel %vm1504, %v1672, %v1668
    %v1674 = vlaneseq
    %v1675 = vshrl.u32 %v1674, 7
    %v1676 = vsub.s32 %v1506, %v1675
    %v1677 = vrot.slane %v408, %v1676
    %v1678 = vsel %vm1511, %v1677, %v1673
    %v1679 = vlaneseq
    %v1680 = vshrl.u32 %v1679, 7
    %v1681 = vsub.s32 %v1513, %v1680
    %v1682 = vrot.slane %v411, %v1681
    %v1683 = vsel %vm1518, %v1682, %v1678
    %v1684 = vlaneseq
    %v1685 = vshrl.u32 %v1684, 7
    %v1686 = vsub.s32 %v1520, %v1685
    %v1687 = vrot.slane %v414, %v1686
    %v1688 = vsel %vm1525, %v1687, %v1683
    %v1689 = vlaneseq
    %v1690 = vshrl.u32 %v1689, 7
    %v1691 = vsub.s32 %v1527, %v1690
    %v1692 = vrot.slane %v417, %v1691
    %v1693 = vsel %vm1532, %v1692, %v1688
    %v1694 = vlaneseq
    %v1695 = vshrl.u32 %v1694, 7
    %v1696 = vsub.s32 %v1534, %v1695
    %v1697 = vrot.slane %v420, %v1696
    %v1698 = vsel %vm1539, %v1697, %v1693
    %v1699 = vlaneseq
    %v1700 = vshrl.u32 %v1699, 7
    %v1701 = vsub.s32 %v1431, %v1700
    %v1702 = vrot.slane %v423, %v1701
    %v1703 = vlaneseq
    %v1704 = vshrl.u32 %v1703, 7
    %v1705 = vsub.s32 %v1436, %v1704
    %v1706 = vrot.slane %v426, %v1705
    %v1707 = vsel %vm1441, %v1706, %v1702
    %v1708 = vlaneseq
    %v1709 = vshrl.u32 %v1708, 7
    %v1710 = vsub.s32 %v1443, %v1709
    %v1711 = vrot.slane %v429, %v1710
    %v1712 = vsel %vm1448, %v1711, %v1707
    %v1713 = vlaneseq
    %v1714 = vshrl.u32 %v1713, 7
    %v1715 = vsub.s32 %v1450, %v1714
    %v1716 = vrot.slane %v432, %v1715
    %v1717 = vsel %vm1455, %v1716, %v1712
    %v1718 = vlaneseq
    %v1719 = vshrl.u32 %v1718, 7
    %v1720 = vsub.s32 %v1457, %v1719
    %v1721 = vrot.slane %v435, %v1720
    %v1722 = vsel %vm1462, %v1721, %v1717
    %v1723 = vlaneseq
    %v1724 = vshrl.u32 %v1723, 7
    %v1725 = vsub.s32 %v1464, %v1724
    %v1726 = vrot.slane %v438, %v1725
    %v1727 = vsel %vm1469, %v1726, %v1722
    %v1728 = vlaneseq
    %v1729 = vshrl.u32 %v1728, 7
    %v1730 = vsub.s32 %v1471, %v1729
    %v1731 = vrot.slane %v441, %v1730
    %v1732 = vsel %vm1476, %v1731, %v1727
    %v1733 = vlaneseq
    %v1734 = vshrl.u32 %v1733, 7
    %v1735 = vsub.s32 %v1478, %v1734
    %v1736 = vrot.slane %v444, %v1735
    %v1737 = vsel %vm1483, %v1736, %v1732
    %v1738 = vlaneseq
    %v1739 = vshrl.u32 %v1738, 7
    %v1740 = vsub.s32 %v1485, %v1739
    %v1741 = vrot.slane %v447, %v1740
    %v1742 = vsel %vm1490, %v1741, %v1737
    %v1743 = vlaneseq
    %v1744 = vshrl.u32 %v1743, 7
    %v1745 = vsub.s32 %v1492, %v1744
    %v1746 = vrot.slane %v450, %v1745
    %v1747 = vsel %vm1497, %v1746, %v1742
    %v1748 = vlaneseq
    %v1749 = vshrl.u32 %v1748, 7
    %v1750 = vsub.s32 %v1499, %v1749
    %v1751 = vrot.slane %v453, %v1750
    %v1752 = vsel %vm1504, %v1751, %v1747
    %v1753 = vlaneseq
    %v1754 = vshrl.u32 %v1753, 7
    %v1755 = vsub.s32 %v1506, %v1754
    %v1756 = vrot.slane %v456, %v1755
    %v1757 = vsel %vm1511, %v1756, %v1752
    %v1758 = vlaneseq
    %v1759 = vshrl.u32 %v1758, 7
    %v1760 = vsub.s32 %v1513, %v1759
    %v1761 = vrot.slane %v459, %v1760
    %v1762 = vsel %vm1518, %v1761, %v1757
    %v1763 = vlaneseq
    %v1764 = vshrl.u32 %v1763, 7
    %v1765 = vsub.s32 %v1520, %v1764
    %v1766 = vrot.slane %v462, %v1765
    %v1767 = vsel %vm1525, %v1766, %v1762
    %v1768 = vlaneseq
    %v1769 = vshrl.u32 %v1768, 7
    %v1770 = vsub.s32 %v1527, %v1769
    %v1771 = vrot.slane %v465, %v1770
    %v1772 = vsel %vm1532, %v1771, %v1767
    %v1773 = vlaneseq
    %v1774 = vshrl.u32 %v1773, 7
    %v1775 = vsub.s32 %v1534, %v1774
    %v1776 = vrot.slane %v468, %v1775
    %v1777 = vsel %vm1539, %v1776, %v1772
    %v1778 = vlaneseq
    %v1779 = vshrl.u32 %v1778, 7
    %v1780 = vsub.s32 %v1431, %v1779
    %v1781 = vrot.slane %v471, %v1780
    %v1782 = vlaneseq
    %v1783 = vshrl.u32 %v1782, 7
    %v1784 = vsub.s32 %v1436, %v1783
    %v1785 = vrot.slane %v474, %v1784
    %v1786 = vsel %vm1441, %v1785, %v1781
    %v1787 = vlaneseq
    %v1788 = vshrl.u32 %v1787, 7
    %v1789 = vsub.s32 %v1443, %v1788
    %v1790 = vrot.slane %v477, %v1789
    %v1791 = vsel %vm1448, %v1790, %v1786
    %v1792 = vlaneseq
    %v1793 = vshrl.u32 %v1792, 7
    %v1794 = vsub.s32 %v1450, %v1793
    %v1795 = vrot.slane %v480, %v1794
    %v1796 = vsel %vm1455, %v1795, %v1791
    %v1797 = vlaneseq
    %v1798 = vshrl.u32 %v1797, 7
    %v1799 = vsub.s32 %v1457, %v1798
    %v1800 = vrot.slane %v483, %v1799
    %v1801 = vsel %vm1462, %v1800, %v1796
    %v1802 = vlaneseq
    %v1803 = vshrl.u32 %v1802, 7
    %v1804 = vsub.s32 %v1464, %v1803
    %v1805 = vrot.slane %v486, %v1804
    %v1806 = vsel %vm1469, %v1805, %v1801
    %v1807 = vlaneseq
    %v1808 = vshrl.u32 %v1807, 7
    %v1809 = vsub.s32 %v1471, %v1808
    %v1810 = vrot.slane %v489, %v1809
    %v1811 = vsel %vm1476, %v1810, %v1806
    %v1812 = vlaneseq
    %v1813 = vshrl.u32 %v1812, 7
    %v1814 = vsub.s32 %v1478, %v1813
    %v1815 = vrot.slane %v492, %v1814
    %v1816 = vsel %vm1483, %v1815, %v1811
    %v1817 = vlaneseq
    %v1818 = vshrl.u32 %v1817, 7
    %v1819 = vsub.s32 %v1485, %v1818
    %v1820 = vrot.slane %v495, %v1819
    %v1821 = vsel %vm1490, %v1820, %v1816
    %v1822 = vlaneseq
    %v1823 = vshrl.u32 %v1822, 7
    %v1824 = vsub.s32 %v1492, %v1823
    %v1825 = vrot.slane %v498, %v1824
    %v1826 = vsel %vm1497, %v1825, %v1821
    %v1827 = vlaneseq
    %v1828 = vshrl.u32 %v1827, 7
    %v1829 = vsub.s32 %v1499, %v1828
    %v1830 = vrot.slane %v501, %v1829
    %v1831 = vsel %vm1504, %v1830, %v1826
    %v1832 = vlaneseq
    %v1833 = vshrl.u32 %v1832, 7
    %v1834 = vsub.s32 %v1506, %v1833
    %v1835 = vrot.slane %v504, %v1834
    %v1836 = vsel %vm1511, %v1835, %v1831
    %v1837 = vlaneseq
    %v1838 = vshrl.u32 %v1837, 7
    %v1839 = vsub.s32 %v1513, %v1838
    %v1840 = vrot.slane %v507, %v1839
    %v1841 = vsel %vm1518, %v1840, %v1836
    %v1842 = vlaneseq
    %v1843 = vshrl.u32 %v1842, 7
    %v1844 = vsub.s32 %v1520, %v1843
    %v1845 = vrot.slane %v510, %v1844
    %v1846 = vsel %vm1525, %v1845, %v1841
    %v1847 = vlaneseq
    %v1848 = vshrl.u32 %v1847, 7
    %v1849 = vsub.s32 %v1527, %v1848
    %v1850 = vrot.slane %v513, %v1849
    %v1851 = vsel %vm1532, %v1850, %v1846
    %v1852 = vlaneseq
    %v1853 = vshrl.u32 %v1852, 7
    %v1854 = vsub.s32 %v1534, %v1853
    %v1855 = vrot.slane %v516, %v1854
    %v1856 = vsel %vm1539, %v1855, %v1851
    %v1857 = vlaneseq
    %v1858 = vshrl.u32 %v1857, 7
    %v1859 = vsub.s32 %v1431, %v1858
    %v1860 = vrot.slane %v519, %v1859
    %v1861 = vlaneseq
    %v1862 = vshrl.u32 %v1861, 7
    %v1863 = vsub.s32 %v1436, %v1862
    %v1864 = vrot.slane %v522, %v1863
    %v1865 = vsel %vm1441, %v1864, %v1860
    %v1866 = vlaneseq
    %v1867 = vshrl.u32 %v1866, 7
    %v1868 = vsub.s32 %v1443, %v1867
    %v1869 = vrot.slane %v525, %v1868
    %v1870 = vsel %vm1448, %v1869, %v1865
    %v1871 = vlaneseq
    %v1872 = vshrl.u32 %v1871, 7
    %v1873 = vsub.s32 %v1450, %v1872
    %v1874 = vrot.slane %v528, %v1873
    %v1875 = vsel %vm1455, %v1874, %v1870
    %v1876 = vlaneseq
    %v1877 = vshrl.u32 %v1876, 7
    %v1878 = vsub.s32 %v1457, %v1877
    %v1879 = vrot.slane %v531, %v1878
    %v1880 = vsel %vm1462, %v1879, %v1875
    %v1881 = vlaneseq
    %v1882 = vshrl.u32 %v1881, 7
    %v1883 = vsub.s32 %v1464, %v1882
    %v1884 = vrot.slane %v534, %v1883
    %v1885 = vsel %vm1469, %v1884, %v1880
    %v1886 = vlaneseq
    %v1887 = vshrl.u32 %v1886, 7
    %v1888 = vsub.s32 %v1471, %v1887
    %v1889 = vrot.slane %v537, %v1888
    %v1890 = vsel %vm1476, %v1889, %v1885
    %v1891 = vlaneseq
    %v1892 = vshrl.u32 %v1891, 7
    %v1893 = vsub.s32 %v1478, %v1892
    %v1894 = vrot.slane %v540, %v1893
    %v1895 = vsel %vm1483, %v1894, %v1890
    %v1896 = vlaneseq
    %v1897 = vshrl.u32 %v1896, 7
    %v1898 = vsub.s32 %v1485, %v1897
    %v1899 = vrot.slane %v543, %v1898
    %v1900 = vsel %vm1490, %v1899, %v1895
    %v1901 = vlaneseq
    %v1902 = vshrl.u32 %v1901, 7
    %v1903 = vsub.s32 %v1492, %v1902
    %v1904 = vrot.slane %v546, %v1903
    %v1905 = vsel %vm1497, %v1904, %v1900
    %v1906 = vlaneseq
    %v1907 = vshrl.u32 %v1906, 7
    %v1908 = vsub.s32 %v1499, %v1907
    %v1909 = vrot.slane %v549, %v1908
    %v1910 = vsel %vm1504, %v1909, %v1905
    %v1911 = vlaneseq
    %v1912 = vshrl.u32 %v1911, 7
    %v1913 = vsub.s32 %v1506, %v1912
    %v1914 = vrot.slane %v552, %v1913
    %v1915 = vsel %vm1511, %v1914, %v1910
    %v1916 = vlaneseq
    %v1917 = vshrl.u32 %v1916, 7
    %v1918 = vsub.s32 %v1513, %v1917
    %v1919 = vrot.slane %v555, %v1918
    %v1920 = vsel %vm1518, %v1919, %v1915
    %v1921 = vlaneseq
    %v1922 = vshrl.u32 %v1921, 7
    %v1923 = vsub.s32 %v1520, %v1922
    %v1924 = vrot.slane %v558, %v1923
    %v1925 = vsel %vm1525, %v1924, %v1920
    %v1926 = vlaneseq
    %v1927 = vshrl.u32 %v1926, 7
    %v1928 = vsub.s32 %v1527, %v1927
    %v1929 = vrot.slane %v561, %v1928
    %v1930 = vsel %vm1532, %v1929, %v1925
    %v1931 = vlaneseq
    %v1932 = vshrl.u32 %v1931, 7
    %v1933 = vsub.s32 %v1534, %v1932
    %v1934 = vrot.slane %v564, %v1933
    %v1935 = vsel %vm1539, %v1934, %v1930
    %v1936 = vlaneseq
    %v1937 = vshrl.u32 %v1936, 7
    %v1938 = vsub.s32 %v1431, %v1937
    %v1939 = vrot.slane %v567, %v1938
    %v1940 = vlaneseq
    %v1941 = vshrl.u32 %v1940, 7
    %v1942 = vsub.s32 %v1436, %v1941
    %v1943 = vrot.slane %v570, %v1942
    %v1944 = vsel %vm1441, %v1943, %v1939
    %v1945 = vlaneseq
    %v1946 = vshrl.u32 %v1945, 7
    %v1947 = vsub.s32 %v1443, %v1946
    %v1948 = vrot.slane %v573, %v1947
    %v1949 = vsel %vm1448, %v1948, %v1944
    %v1950 = vlaneseq
    %v1951 = vshrl.u32 %v1950, 7
    %v1952 = vsub.s32 %v1450, %v1951
    %v1953 = vrot.slane %v576, %v1952
    %v1954 = vsel %vm1455, %v1953, %v1949
    %v1955 = vlaneseq
    %v1956 = vshrl.u32 %v1955, 7
    %v1957 = vsub.s32 %v1457, %v1956
    %v1958 = vrot.slane %v579, %v1957
    %v1959 = vsel %vm1462, %v1958, %v1954
    %v1960 = vlaneseq
    %v1961 = vshrl.u32 %v1960, 7
    %v1962 = vsub.s32 %v1464, %v1961
    %v1963 = vrot.slane %v582, %v1962
    %v1964 = vsel %vm1469, %v1963, %v1959
    %v1965 = vlaneseq
    %v1966 = vshrl.u32 %v1965, 7
    %v1967 = vsub.s32 %v1471, %v1966
    %v1968 = vrot.slane %v585, %v1967
    %v1969 = vsel %vm1476, %v1968, %v1964
    %v1970 = vlaneseq
    %v1971 = vshrl.u32 %v1970, 7
    %v1972 = vsub.s32 %v1478, %v1971
    %v1973 = vrot.slane %v588, %v1972
    %v1974 = vsel %vm1483, %v1973, %v1969
    %v1975 = vlaneseq
    %v1976 = vshrl.u32 %v1975, 7
    %v1977 = vsub.s32 %v1485, %v1976
    %v1978 = vrot.slane %v591, %v1977
    %v1979 = vsel %vm1490, %v1978, %v1974
    %v1980 = vlaneseq
    %v1981 = vshrl.u32 %v1980, 7
    %v1982 = vsub.s32 %v1492, %v1981
    %v1983 = vrot.slane %v594, %v1982
    %v1984 = vsel %vm1497, %v1983, %v1979
    %v1985 = vlaneseq
    %v1986 = vshrl.u32 %v1985, 7
    %v1987 = vsub.s32 %v1499, %v1986
    %v1988 = vrot.slane %v597, %v1987
    %v1989 = vsel %vm1504, %v1988, %v1984
    %v1990 = vlaneseq
    %v1991 = vshrl.u32 %v1990, 7
    %v1992 = vsub.s32 %v1506, %v1991
    %v1993 = vrot.slane %v600, %v1992
    %v1994 = vsel %vm1511, %v1993, %v1989
    %v1995 = vlaneseq
    %v1996 = vshrl.u32 %v1995, 7
    %v1997 = vsub.s32 %v1513, %v1996
    %v1998 = vrot.slane %v603, %v1997
    %v1999 = vsel %vm1518, %v1998, %v1994
    %v2000 = vlaneseq
    %v2001 = vshrl.u32 %v2000, 7
    %v2002 = vsub.s32 %v1520, %v2001
    %v2003 = vrot.slane %v606, %v2002
    %v2004 = vsel %vm1525, %v2003, %v1999
    %v2005 = vlaneseq
    %v2006 = vshrl.u32 %v2005, 7
    %v2007 = vsub.s32 %v1527, %v2006
    %v2008 = vrot.slane %v609, %v2007
    %v2009 = vsel %vm1532, %v2008, %v2004
    %v2010 = vlaneseq
    %v2011 = vshrl.u32 %v2010, 7
    %v2012 = vsub.s32 %v1534, %v2011
    %v2013 = vrot.slane %v612, %v2012
    %v2014 = vsel %vm1539, %v2013, %v2009
    %v2015 = vlaneseq
    %v2016 = vshrl.u32 %v2015, 7
    %v2017 = vsub.s32 %v1431, %v2016
    %v2018 = vrot.slane %v615, %v2017
    %v2019 = vlaneseq
    %v2020 = vshrl.u32 %v2019, 7
    %v2021 = vsub.s32 %v1436, %v2020
    %v2022 = vrot.slane %v618, %v2021
    %v2023 = vsel %vm1441, %v2022, %v2018
    %v2024 = vlaneseq
    %v2025 = vshrl.u32 %v2024, 7
    %v2026 = vsub.s32 %v1443, %v2025
    %v2027 = vrot.slane %v621, %v2026
    %v2028 = vsel %vm1448, %v2027, %v2023
    %v2029 = vlaneseq
    %v2030 = vshrl.u32 %v2029, 7
    %v2031 = vsub.s32 %v1450, %v2030
    %v2032 = vrot.slane %v624, %v2031
    %v2033 = vsel %vm1455, %v2032, %v2028
    %v2034 = vlaneseq
    %v2035 = vshrl.u32 %v2034, 7
    %v2036 = vsub.s32 %v1457, %v2035
    %v2037 = vrot.slane %v627, %v2036
    %v2038 = vsel %vm1462, %v2037, %v2033
    %v2039 = vlaneseq
    %v2040 = vshrl.u32 %v2039, 7
    %v2041 = vsub.s32 %v1464, %v2040
    %v2042 = vrot.slane %v630, %v2041
    %v2043 = vsel %vm1469, %v2042, %v2038
    %v2044 = vlaneseq
    %v2045 = vshrl.u32 %v2044, 7
    %v2046 = vsub.s32 %v1471, %v2045
    %v2047 = vrot.slane %v633, %v2046
    %v2048 = vsel %vm1476, %v2047, %v2043
    %v2049 = vlaneseq
    %v2050 = vshrl.u32 %v2049, 7
    %v2051 = vsub.s32 %v1478, %v2050
    %v2052 = vrot.slane %v636, %v2051
    %v2053 = vsel %vm1483, %v2052, %v2048
    %v2054 = vlaneseq
    %v2055 = vshrl.u32 %v2054, 7
    %v2056 = vsub.s32 %v1485, %v2055
    %v2057 = vrot.slane %v639, %v2056
    %v2058 = vsel %vm1490, %v2057, %v2053
    %v2059 = vlaneseq
    %v2060 = vshrl.u32 %v2059, 7
    %v2061 = vsub.s32 %v1492, %v2060
    %v2062 = vrot.slane %v642, %v2061
    %v2063 = vsel %vm1497, %v2062, %v2058
    %v2064 = vlaneseq
    %v2065 = vshrl.u32 %v2064, 7
    %v2066 = vsub.s32 %v1499, %v2065
    %v2067 = vrot.slane %v645, %v2066
    %v2068 = vsel %vm1504, %v2067, %v2063
    %v2069 = vlaneseq
    %v2070 = vshrl.u32 %v2069, 7
    %v2071 = vsub.s32 %v1506, %v2070
    %v2072 = vrot.slane %v648, %v2071
    %v2073 = vsel %vm1511, %v2072, %v2068
    %v2074 = vlaneseq
    %v2075 = vshrl.u32 %v2074, 7
    %v2076 = vsub.s32 %v1513, %v2075
    %v2077 = vrot.slane %v651, %v2076
    %v2078 = vsel %vm1518, %v2077, %v2073
    %v2079 = vlaneseq
    %v2080 = vshrl.u32 %v2079, 7
    %v2081 = vsub.s32 %v1520, %v2080
    %v2082 = vrot.slane %v654, %v2081
    %v2083 = vsel %vm1525, %v2082, %v2078
    %v2084 = vlaneseq
    %v2085 = vshrl.u32 %v2084, 7
    %v2086 = vsub.s32 %v1527, %v2085
    %v2087 = vrot.slane %v657, %v2086
    %v2088 = vsel %vm1532, %v2087, %v2083
    %v2089 = vlaneseq
    %v2090 = vshrl.u32 %v2089, 7
    %v2091 = vsub.s32 %v1534, %v2090
    %v2092 = vrot.slane %v660, %v2091
    %v2093 = vsel %vm1539, %v2092, %v2088
    %v2094 = vlaneseq
    %v2095 = vshrl.u32 %v2094, 7
    %v2096 = vsub.s32 %v1431, %v2095
    %v2097 = vrot.slane %v663, %v2096
    %v2098 = vlaneseq
    %v2099 = vshrl.u32 %v2098, 7
    %v2100 = vsub.s32 %v1436, %v2099
    %v2101 = vrot.slane %v666, %v2100
    %v2102 = vsel %vm1441, %v2101, %v2097
    %v2103 = vlaneseq
    %v2104 = vshrl.u32 %v2103, 7
    %v2105 = vsub.s32 %v1443, %v2104
    %v2106 = vrot.slane %v669, %v2105
    %v2107 = vsel %vm1448, %v2106, %v2102
    %v2108 = vlaneseq
    %v2109 = vshrl.u32 %v2108, 7
    %v2110 = vsub.s32 %v1450, %v2109
    %v2111 = vrot.slane %v672, %v2110
    %v2112 = vsel %vm1455, %v2111, %v2107
    %v2113 = vlaneseq
    %v2114 = vshrl.u32 %v2113, 7
    %v2115 = vsub.s32 %v1457, %v2114
    %v2116 = vrot.slane %v675, %v2115
    %v2117 = vsel %vm1462, %v2116, %v2112
    %v2118 = vlaneseq
    %v2119 = vshrl.u32 %v2118, 7
    %v2120 = vsub.s32 %v1464, %v2119
    %v2121 = vrot.slane %v678, %v2120
    %v2122 = vsel %vm1469, %v2121, %v2117
    %v2123 = vlaneseq
    %v2124 = vshrl.u32 %v2123, 7
    %v2125 = vsub.s32 %v1471, %v2124
    %v2126 = vrot.slane %v681, %v2125
    %v2127 = vsel %vm1476, %v2126, %v2122
    %v2128 = vlaneseq
    %v2129 = vshrl.u32 %v2128, 7
    %v2130 = vsub.s32 %v1478, %v2129
    %v2131 = vrot.slane %v684, %v2130
    %v2132 = vsel %vm1483, %v2131, %v2127
    %v2133 = vlaneseq
    %v2134 = vshrl.u32 %v2133, 7
    %v2135 = vsub.s32 %v1485, %v2134
    %v2136 = vrot.slane %v687, %v2135
    %v2137 = vsel %vm1490, %v2136, %v2132
    %v2138 = vlaneseq
    %v2139 = vshrl.u32 %v2138, 7
    %v2140 = vsub.s32 %v1492, %v2139
    %v2141 = vrot.slane %v690, %v2140
    %v2142 = vsel %vm1497, %v2141, %v2137
    %v2143 = vlaneseq
    %v2144 = vshrl.u32 %v2143, 7
    %v2145 = vsub.s32 %v1499, %v2144
    %v2146 = vrot.slane %v693, %v2145
    %v2147 = vsel %vm1504, %v2146, %v2142
    %v2148 = vlaneseq
    %v2149 = vshrl.u32 %v2148, 7
    %v2150 = vsub.s32 %v1506, %v2149
    %v2151 = vrot.slane %v696, %v2150
    %v2152 = vsel %vm1511, %v2151, %v2147
    %v2153 = vlaneseq
    %v2154 = vshrl.u32 %v2153, 7
    %v2155 = vsub.s32 %v1513, %v2154
    %v2156 = vrot.slane %v699, %v2155
    %v2157 = vsel %vm1518, %v2156, %v2152
    %v2158 = vlaneseq
    %v2159 = vshrl.u32 %v2158, 7
    %v2160 = vsub.s32 %v1520, %v2159
    %v2161 = vrot.slane %v702, %v2160
    %v2162 = vsel %vm1525, %v2161, %v2157
    %v2163 = vlaneseq
    %v2164 = vshrl.u32 %v2163, 7
    %v2165 = vsub.s32 %v1527, %v2164
    %v2166 = vrot.slane %v705, %v2165
    %v2167 = vsel %vm1532, %v2166, %v2162
    %v2168 = vlaneseq
    %v2169 = vshrl.u32 %v2168, 7
    %v2170 = vsub.s32 %v1534, %v2169
    %v2171 = vrot.slane %v708, %v2170
    %v2172 = vsel %vm1539, %v2171, %v2167
    %v2173 = vlaneseq
    %v2174 = vshrl.u32 %v2173, 7
    %v2175 = vsub.s32 %v1431, %v2174
    %v2176 = vrot.slane %v711, %v2175
    %v2177 = vlaneseq
    %v2178 = vshrl.u32 %v2177, 7
    %v2179 = vsub.s32 %v1436, %v2178
    %v2180 = vrot.slane %v714, %v2179
    %v2181 = vsel %vm1441, %v2180, %v2176
    %v2182 = vlaneseq
    %v2183 = vshrl.u32 %v2182, 7
    %v2184 = vsub.s32 %v1443, %v2183
    %v2185 = vrot.slane %v717, %v2184
    %v2186 = vsel %vm1448, %v2185, %v2181
    %v2187 = vlaneseq
    %v2188 = vshrl.u32 %v2187, 7
    %v2189 = vsub.s32 %v1450, %v2188
    %v2190 = vrot.slane %v720, %v2189
    %v2191 = vsel %vm1455, %v2190, %v2186
    %v2192 = vlaneseq
    %v2193 = vshrl.u32 %v2192, 7
    %v2194 = vsub.s32 %v1457, %v2193
    %v2195 = vrot.slane %v723, %v2194
    %v2196 = vsel %vm1462, %v2195, %v2191
    %v2197 = vlaneseq
    %v2198 = vshrl.u32 %v2197, 7
    %v2199 = vsub.s32 %v1464, %v2198
    %v2200 = vrot.slane %v726, %v2199
    %v2201 = vsel %vm1469, %v2200, %v2196
    %v2202 = vlaneseq
    %v2203 = vshrl.u32 %v2202, 7
    %v2204 = vsub.s32 %v1471, %v2203
    %v2205 = vrot.slane %v729, %v2204
    %v2206 = vsel %vm1476, %v2205, %v2201
    %v2207 = vlaneseq
    %v2208 = vshrl.u32 %v2207, 7
    %v2209 = vsub.s32 %v1478, %v2208
    %v2210 = vrot.slane %v732, %v2209
    %v2211 = vsel %vm1483, %v2210, %v2206
    %v2212 = vlaneseq
    %v2213 = vshrl.u32 %v2212, 7
    %v2214 = vsub.s32 %v1485, %v2213
    %v2215 = vrot.slane %v735, %v2214
    %v2216 = vsel %vm1490, %v2215, %v2211
    %v2217 = vlaneseq
    %v2218 = vshrl.u32 %v2217, 7
    %v2219 = vsub.s32 %v1492, %v2218
    %v2220 = vrot.slane %v738, %v2219
    %v2221 = vsel %vm1497, %v2220, %v2216
    %v2222 = vlaneseq
    %v2223 = vshrl.u32 %v2222, 7
    %v2224 = vsub.s32 %v1499, %v2223
    %v2225 = vrot.slane %v741, %v2224
    %v2226 = vsel %vm1504, %v2225, %v2221
    %v2227 = vlaneseq
    %v2228 = vshrl.u32 %v2227, 7
    %v2229 = vsub.s32 %v1506, %v2228
    %v2230 = vrot.slane %v744, %v2229
    %v2231 = vsel %vm1511, %v2230, %v2226
    %v2232 = vlaneseq
    %v2233 = vshrl.u32 %v2232, 7
    %v2234 = vsub.s32 %v1513, %v2233
    %v2235 = vrot.slane %v747, %v2234
    %v2236 = vsel %vm1518, %v2235, %v2231
    %v2237 = vlaneseq
    %v2238 = vshrl.u32 %v2237, 7
    %v2239 = vsub.s32 %v1520, %v2238
    %v2240 = vrot.slane %v750, %v2239
    %v2241 = vsel %vm1525, %v2240, %v2236
    %v2242 = vlaneseq
    %v2243 = vshrl.u32 %v2242, 7
    %v2244 = vsub.s32 %v1527, %v2243
    %v2245 = vrot.slane %v753, %v2244
    %v2246 = vsel %vm1532, %v2245, %v2241
    %v2247 = vlaneseq
    %v2248 = vshrl.u32 %v2247, 7
    %v2249 = vsub.s32 %v1534, %v2248
    %v2250 = vrot.slane %v756, %v2249
    %v2251 = vsel %vm1539, %v2250, %v2246
    %v2252 = vlaneseq
    %v2253 = vshrl.u32 %v2252, 7
    %v2254 = vsub.s32 %v1431, %v2253
    %v2255 = vrot.slane %v759, %v2254
    %v2256 = vlaneseq
    %v2257 = vshrl.u32 %v2256, 7
    %v2258 = vsub.s32 %v1436, %v2257
    %v2259 = vrot.slane %v762, %v2258
    %v2260 = vsel %vm1441, %v2259, %v2255
    %v2261 = vlaneseq
    %v2262 = vshrl.u32 %v2261, 7
    %v2263 = vsub.s32 %v1443, %v2262
    %v2264 = vrot.slane %v765, %v2263
    %v2265 = vsel %vm1448, %v2264, %v2260
    %v2266 = vlaneseq
    %v2267 = vshrl.u32 %v2266, 7
    %v2268 = vsub.s32 %v1450, %v2267
    %v2269 = vrot.slane %v768, %v2268
    %v2270 = vsel %vm1455, %v2269, %v2265
    %v2271 = vlaneseq
    %v2272 = vshrl.u32 %v2271, 7
    %v2273 = vsub.s32 %v1457, %v2272
    %v2274 = vrot.slane %v771, %v2273
    %v2275 = vsel %vm1462, %v2274, %v2270
    %v2276 = vlaneseq
    %v2277 = vshrl.u32 %v2276, 7
    %v2278 = vsub.s32 %v1464, %v2277
    %v2279 = vrot.slane %v774, %v2278
    %v2280 = vsel %vm1469, %v2279, %v2275
    %v2281 = vlaneseq
    %v2282 = vshrl.u32 %v2281, 7
    %v2283 = vsub.s32 %v1471, %v2282
    %v2284 = vrot.slane %v777, %v2283
    %v2285 = vsel %vm1476, %v2284, %v2280
    %v2286 = vlaneseq
    %v2287 = vshrl.u32 %v2286, 7
    %v2288 = vsub.s32 %v1478, %v2287
    %v2289 = vrot.slane %v780, %v2288
    %v2290 = vsel %vm1483, %v2289, %v2285
    %v2291 = vlaneseq
    %v2292 = vshrl.u32 %v2291, 7
    %v2293 = vsub.s32 %v1485, %v2292
    %v2294 = vrot.slane %v783, %v2293
    %v2295 = vsel %vm1490, %v2294, %v2290
    %v2296 = vlaneseq
    %v2297 = vshrl.u32 %v2296, 7
    %v2298 = vsub.s32 %v1492, %v2297
    %v2299 = vrot.slane %v786, %v2298
    %v2300 = vsel %vm1497, %v2299, %v2295
    %v2301 = vlaneseq
    %v2302 = vshrl.u32 %v2301, 7
    %v2303 = vsub.s32 %v1499, %v2302
    %v2304 = vrot.slane %v789, %v2303
    %v2305 = vsel %vm1504, %v2304, %v2300
    %v2306 = vlaneseq
    %v2307 = vshrl.u32 %v2306, 7
    %v2308 = vsub.s32 %v1506, %v2307
    %v2309 = vrot.slane %v792, %v2308
    %v2310 = vsel %vm1511, %v2309, %v2305
    %v2311 = vlaneseq
    %v2312 = vshrl.u32 %v2311, 7
    %v2313 = vsub.s32 %v1513, %v2312
    %v2314 = vrot.slane %v795, %v2313
    %v2315 = vsel %vm1518, %v2314, %v2310
    %v2316 = vlaneseq
    %v2317 = vshrl.u32 %v2316, 7
    %v2318 = vsub.s32 %v1520, %v2317
    %v2319 = vrot.slane %v798, %v2318
    %v2320 = vsel %vm1525, %v2319, %v2315
    %v2321 = vlaneseq
    %v2322 = vshrl.u32 %v2321, 7
    %v2323 = vsub.s32 %v1527, %v2322
    %v2324 = vrot.slane %v801, %v2323
    %v2325 = vsel %vm1532, %v2324, %v2320
    %v2326 = vlaneseq
    %v2327 = vshrl.u32 %v2326, 7
    %v2328 = vsub.s32 %v1534, %v2327
    %v2329 = vrot.slane %v804, %v2328
    %v2330 = vsel %vm1539, %v2329, %v2325
    %v2331 = vlaneseq
    %v2332 = vshrl.u32 %v2331, 7
    %v2333 = vsub.s32 %v1431, %v2332
    %v2334 = vrot.slane %v807, %v2333
    %v2335 = vlaneseq
    %v2336 = vshrl.u32 %v2335, 7
    %v2337 = vsub.s32 %v1436, %v2336
    %v2338 = vrot.slane %v810, %v2337
    %v2339 = vsel %vm1441, %v2338, %v2334
    %v2340 = vlaneseq
    %v2341 = vshrl.u32 %v2340, 7
    %v2342 = vsub.s32 %v1443, %v2341
    %v2343 = vrot.slane %v813, %v2342
    %v2344 = vsel %vm1448, %v2343, %v2339
    %v2345 = vlaneseq
    %v2346 = vshrl.u32 %v2345, 7
    %v2347 = vsub.s32 %v1450, %v2346
    %v2348 = vrot.slane %v816, %v2347
    %v2349 = vsel %vm1455, %v2348, %v2344
    %v2350 = vlaneseq
    %v2351 = vshrl.u32 %v2350, 7
    %v2352 = vsub.s32 %v1457, %v2351
    %v2353 = vrot.slane %v819, %v2352
    %v2354 = vsel %vm1462, %v2353, %v2349
    %v2355 = vlaneseq
    %v2356 = vshrl.u32 %v2355, 7
    %v2357 = vsub.s32 %v1464, %v2356
    %v2358 = vrot.slane %v822, %v2357
    %v2359 = vsel %vm1469, %v2358, %v2354
    %v2360 = vlaneseq
    %v2361 = vshrl.u32 %v2360, 7
    %v2362 = vsub.s32 %v1471, %v2361
    %v2363 = vrot.slane %v825, %v2362
    %v2364 = vsel %vm1476, %v2363, %v2359
    %v2365 = vlaneseq
    %v2366 = vshrl.u32 %v2365, 7
    %v2367 = vsub.s32 %v1478, %v2366
    %v2368 = vrot.slane %v828, %v2367
    %v2369 = vsel %vm1483, %v2368, %v2364
    %v2370 = vlaneseq
    %v2371 = vshrl.u32 %v2370, 7
    %v2372 = vsub.s32 %v1485, %v2371
    %v2373 = vrot.slane %v831, %v2372
    %v2374 = vsel %vm1490, %v2373, %v2369
    %v2375 = vlaneseq
    %v2376 = vshrl.u32 %v2375, 7
    %v2377 = vsub.s32 %v1492, %v2376
    %v2378 = vrot.slane %v834, %v2377
    %v2379 = vsel %vm1497, %v2378, %v2374
    %v2380 = vlaneseq
    %v2381 = vshrl.u32 %v2380, 7
    %v2382 = vsub.s32 %v1499, %v2381
    %v2383 = vrot.slane %v837, %v2382
    %v2384 = vsel %vm1504, %v2383, %v2379
    %v2385 = vlaneseq
    %v2386 = vshrl.u32 %v2385, 7
    %v2387 = vsub.s32 %v1506, %v2386
    %v2388 = vrot.slane %v840, %v2387
    %v2389 = vsel %vm1511, %v2388, %v2384
    %v2390 = vlaneseq
    %v2391 = vshrl.u32 %v2390, 7
    %v2392 = vsub.s32 %v1513, %v2391
    %v2393 = vrot.slane %v843, %v2392
    %v2394 = vsel %vm1518, %v2393, %v2389
    %v2395 = vlaneseq
    %v2396 = vshrl.u32 %v2395, 7
    %v2397 = vsub.s32 %v1520, %v2396
    %v2398 = vrot.slane %v846, %v2397
    %v2399 = vsel %vm1525, %v2398, %v2394
    %v2400 = vlaneseq
    %v2401 = vshrl.u32 %v2400, 7
    %v2402 = vsub.s32 %v1527, %v2401
    %v2403 = vrot.slane %v849, %v2402
    %v2404 = vsel %vm1532, %v2403, %v2399
    %v2405 = vlaneseq
    %v2406 = vshrl.u32 %v2405, 7
    %v2407 = vsub.s32 %v1534, %v2406
    %v2408 = vrot.slane %v852, %v2407
    %v2409 = vsel %vm1539, %v2408, %v2404
    %v2410 = vlaneseq
    %v2411 = vshrl.u32 %v2410, 7
    %v2412 = vsub.s32 %v1431, %v2411
    %v2413 = vrot.slane %v855, %v2412
    %v2414 = vlaneseq
    %v2415 = vshrl.u32 %v2414, 7
    %v2416 = vsub.s32 %v1436, %v2415
    %v2417 = vrot.slane %v858, %v2416
    %v2418 = vsel %vm1441, %v2417, %v2413
    %v2419 = vlaneseq
    %v2420 = vshrl.u32 %v2419, 7
    %v2421 = vsub.s32 %v1443, %v2420
    %v2422 = vrot.slane %v861, %v2421
    %v2423 = vsel %vm1448, %v2422, %v2418
    %v2424 = vlaneseq
    %v2425 = vshrl.u32 %v2424, 7
    %v2426 = vsub.s32 %v1450, %v2425
    %v2427 = vrot.slane %v864, %v2426
    %v2428 = vsel %vm1455, %v2427, %v2423
    %v2429 = vlaneseq
    %v2430 = vshrl.u32 %v2429, 7
    %v2431 = vsub.s32 %v1457, %v2430
    %v2432 = vrot.slane %v867, %v2431
    %v2433 = vsel %vm1462, %v2432, %v2428
    %v2434 = vlaneseq
    %v2435 = vshrl.u32 %v2434, 7
    %v2436 = vsub.s32 %v1464, %v2435
    %v2437 = vrot.slane %v870, %v2436
    %v2438 = vsel %vm1469, %v2437, %v2433
    %v2439 = vlaneseq
    %v2440 = vshrl.u32 %v2439, 7
    %v2441 = vsub.s32 %v1471, %v2440
    %v2442 = vrot.slane %v873, %v2441
    %v2443 = vsel %vm1476, %v2442, %v2438
    %v2444 = vlaneseq
    %v2445 = vshrl.u32 %v2444, 7
    %v2446 = vsub.s32 %v1478, %v2445
    %v2447 = vrot.slane %v876, %v2446
    %v2448 = vsel %vm1483, %v2447, %v2443
    %v2449 = vlaneseq
    %v2450 = vshrl.u32 %v2449, 7
    %v2451 = vsub.s32 %v1485, %v2450
    %v2452 = vrot.slane %v879, %v2451
    %v2453 = vsel %vm1490, %v2452, %v2448
    %v2454 = vlaneseq
    %v2455 = vshrl.u32 %v2454, 7
    %v2456 = vsub.s32 %v1492, %v2455
    %v2457 = vrot.slane %v882, %v2456
    %v2458 = vsel %vm1497, %v2457, %v2453
    %v2459 = vlaneseq
    %v2460 = vshrl.u32 %v2459, 7
    %v2461 = vsub.s32 %v1499, %v2460
    %v2462 = vrot.slane %v885, %v2461
    %v2463 = vsel %vm1504, %v2462, %v2458
    %v2464 = vlaneseq
    %v2465 = vshrl.u32 %v2464, 7
    %v2466 = vsub.s32 %v1506, %v2465
    %v2467 = vrot.slane %v888, %v2466
    %v2468 = vsel %vm1511, %v2467, %v2463
    %v2469 = vlaneseq
    %v2470 = vshrl.u32 %v2469, 7
    %v2471 = vsub.s32 %v1513, %v2470
    %v2472 = vrot.slane %v891, %v2471
    %v2473 = vsel %vm1518, %v2472, %v2468
    %v2474 = vlaneseq
    %v2475 = vshrl.u32 %v2474, 7
    %v2476 = vsub.s32 %v1520, %v2475
    %v2477 = vrot.slane %v894, %v2476
    %v2478 = vsel %vm1525, %v2477, %v2473
    %v2479 = vlaneseq
    %v2480 = vshrl.u32 %v2479, 7
    %v2481 = vsub.s32 %v1527, %v2480
    %v2482 = vrot.slane %v897, %v2481
    %v2483 = vsel %vm1532, %v2482, %v2478
    %v2484 = vlaneseq
    %v2485 = vshrl.u32 %v2484, 7
    %v2486 = vsub.s32 %v1534, %v2485
    %v2487 = vrot.slane %v900, %v2486
    %v2488 = vsel %vm1539, %v2487, %v2483
    %v2489 = vlaneseq
    %v2490 = vshrl.u32 %v2489, 7
    %v2491 = vsub.s32 %v1431, %v2490
    %v2492 = vrot.slane %v903, %v2491
    %v2493 = vlaneseq
    %v2494 = vshrl.u32 %v2493, 7
    %v2495 = vsub.s32 %v1436, %v2494
    %v2496 = vrot.slane %v906, %v2495
    %v2497 = vsel %vm1441, %v2496, %v2492
    %v2498 = vlaneseq
    %v2499 = vshrl.u32 %v2498, 7
    %v2500 = vsub.s32 %v1443, %v2499
    %v2501 = vrot.slane %v909, %v2500
    %v2502 = vsel %vm1448, %v2501, %v2497
    %v2503 = vlaneseq
    %v2504 = vshrl.u32 %v2503, 7
    %v2505 = vsub.s32 %v1450, %v2504
    %v2506 = vrot.slane %v912, %v2505
    %v2507 = vsel %vm1455, %v2506, %v2502
    %v2508 = vlaneseq
    %v2509 = vshrl.u32 %v2508, 7
    %v2510 = vsub.s32 %v1457, %v2509
    %v2511 = vrot.slane %v915, %v2510
    %v2512 = vsel %vm1462, %v2511, %v2507
    %v2513 = vlaneseq
    %v2514 = vshrl.u32 %v2513, 7
    %v2515 = vsub.s32 %v1464, %v2514
    %v2516 = vrot.slane %v918, %v2515
    %v2517 = vsel %vm1469, %v2516, %v2512
    %v2518 = vlaneseq
    %v2519 = vshrl.u32 %v2518, 7
    %v2520 = vsub.s32 %v1471, %v2519
    %v2521 = vrot.slane %v921, %v2520
    %v2522 = vsel %vm1476, %v2521, %v2517
    %v2523 = vlaneseq
    %v2524 = vshrl.u32 %v2523, 7
    %v2525 = vsub.s32 %v1478, %v2524
    %v2526 = vrot.slane %v924, %v2525
    %v2527 = vsel %vm1483, %v2526, %v2522
    %v2528 = vlaneseq
    %v2529 = vshrl.u32 %v2528, 7
    %v2530 = vsub.s32 %v1485, %v2529
    %v2531 = vrot.slane %v927, %v2530
    %v2532 = vsel %vm1490, %v2531, %v2527
    %v2533 = vlaneseq
    %v2534 = vshrl.u32 %v2533, 7
    %v2535 = vsub.s32 %v1492, %v2534
    %v2536 = vrot.slane %v930, %v2535
    %v2537 = vsel %vm1497, %v2536, %v2532
    %v2538 = vlaneseq
    %v2539 = vshrl.u32 %v2538, 7
    %v2540 = vsub.s32 %v1499, %v2539
    %v2541 = vrot.slane %v933, %v2540
    %v2542 = vsel %vm1504, %v2541, %v2537
    %v2543 = vlaneseq
    %v2544 = vshrl.u32 %v2543, 7
    %v2545 = vsub.s32 %v1506, %v2544
    %v2546 = vrot.slane %v936, %v2545
    %v2547 = vsel %vm1511, %v2546, %v2542
    %v2548 = vlaneseq
    %v2549 = vshrl.u32 %v2548, 7
    %v2550 = vsub.s32 %v1513, %v2549
    %v2551 = vrot.slane %v939, %v2550
    %v2552 = vsel %vm1518, %v2551, %v2547
    %v2553 = vlaneseq
    %v2554 = vshrl.u32 %v2553, 7
    %v2555 = vsub.s32 %v1520, %v2554
    %v2556 = vrot.slane %v942, %v2555
    %v2557 = vsel %vm1525, %v2556, %v2552
    %v2558 = vlaneseq
    %v2559 = vshrl.u32 %v2558, 7
    %v2560 = vsub.s32 %v1527, %v2559
    %v2561 = vrot.slane %v945, %v2560
    %v2562 = vsel %vm1532, %v2561, %v2557
    %v2563 = vlaneseq
    %v2564 = vshrl.u32 %v2563, 7
    %v2565 = vsub.s32 %v1534, %v2564
    %v2566 = vrot.slane %v948, %v2565
    %v2567 = vsel %vm1539, %v2566, %v2562
    %v2568 = vlaneseq
    %v2569 = vshrl.u32 %v2568, 7
    %v2570 = vsub.s32 %v1431, %v2569
    %v2571 = vrot.slane %v951, %v2570
    %v2572 = vlaneseq
    %v2573 = vshrl.u32 %v2572, 7
    %v2574 = vsub.s32 %v1436, %v2573
    %v2575 = vrot.slane %v954, %v2574
    %v2576 = vsel %vm1441, %v2575, %v2571
    %v2577 = vlaneseq
    %v2578 = vshrl.u32 %v2577, 7
    %v2579 = vsub.s32 %v1443, %v2578
    %v2580 = vrot.slane %v957, %v2579
    %v2581 = vsel %vm1448, %v2580, %v2576
    %v2582 = vlaneseq
    %v2583 = vshrl.u32 %v2582, 7
    %v2584 = vsub.s32 %v1450, %v2583
    %v2585 = vrot.slane %v960, %v2584
    %v2586 = vsel %vm1455, %v2585, %v2581
    %v2587 = vlaneseq
    %v2588 = vshrl.u32 %v2587, 7
    %v2589 = vsub.s32 %v1457, %v2588
    %v2590 = vrot.slane %v963, %v2589
    %v2591 = vsel %vm1462, %v2590, %v2586
    %v2592 = vlaneseq
    %v2593 = vshrl.u32 %v2592, 7
    %v2594 = vsub.s32 %v1464, %v2593
    %v2595 = vrot.slane %v966, %v2594
    %v2596 = vsel %vm1469, %v2595, %v2591
    %v2597 = vlaneseq
    %v2598 = vshrl.u32 %v2597, 7
    %v2599 = vsub.s32 %v1471, %v2598
    %v2600 = vrot.slane %v969, %v2599
    %v2601 = vsel %vm1476, %v2600, %v2596
    %v2602 = vlaneseq
    %v2603 = vshrl.u32 %v2602, 7
    %v2604 = vsub.s32 %v1478, %v2603
    %v2605 = vrot.slane %v972, %v2604
    %v2606 = vsel %vm1483, %v2605, %v2601
    %v2607 = vlaneseq
    %v2608 = vshrl.u32 %v2607, 7
    %v2609 = vsub.s32 %v1485, %v2608
    %v2610 = vrot.slane %v975, %v2609
    %v2611 = vsel %vm1490, %v2610, %v2606
    %v2612 = vlaneseq
    %v2613 = vshrl.u32 %v2612, 7
    %v2614 = vsub.s32 %v1492, %v2613
    %v2615 = vrot.slane %v978, %v2614
    %v2616 = vsel %vm1497, %v2615, %v2611
    %v2617 = vlaneseq
    %v2618 = vshrl.u32 %v2617, 7
    %v2619 = vsub.s32 %v1499, %v2618
    %v2620 = vrot.slane %v981, %v2619
    %v2621 = vsel %vm1504, %v2620, %v2616
    %v2622 = vlaneseq
    %v2623 = vshrl.u32 %v2622, 7
    %v2624 = vsub.s32 %v1506, %v2623
    %v2625 = vrot.slane %v984, %v2624
    %v2626 = vsel %vm1511, %v2625, %v2621
    %v2627 = vlaneseq
    %v2628 = vshrl.u32 %v2627, 7
    %v2629 = vsub.s32 %v1513, %v2628
    %v2630 = vrot.slane %v987, %v2629
    %v2631 = vsel %vm1518, %v2630, %v2626
    %v2632 = vlaneseq
    %v2633 = vshrl.u32 %v2632, 7
    %v2634 = vsub.s32 %v1520, %v2633
    %v2635 = vrot.slane %v990, %v2634
    %v2636 = vsel %vm1525, %v2635, %v2631
    %v2637 = vlaneseq
    %v2638 = vshrl.u32 %v2637, 7
    %v2639 = vsub.s32 %v1527, %v2638
    %v2640 = vrot.slane %v993, %v2639
    %v2641 = vsel %vm1532, %v2640, %v2636
    %v2642 = vlaneseq
    %v2643 = vshrl.u32 %v2642, 7
    %v2644 = vsub.s32 %v1534, %v2643
    %v2645 = vrot.slane %v996, %v2644
    %v2646 = vsel %vm1539, %v2645, %v2641
    %v2647 = vlaneseq
    %v2648 = vshrl.u32 %v2647, 7
    %v2649 = vsub.s32 %v1431, %v2648
    %v2650 = vrot.slane %v999, %v2649
    %v2651 = vlaneseq
    %v2652 = vshrl.u32 %v2651, 7
    %v2653 = vsub.s32 %v1436, %v2652
    %v2654 = vrot.slane %v1002, %v2653
    %v2655 = vsel %vm1441, %v2654, %v2650
    %v2656 = vlaneseq
    %v2657 = vshrl.u32 %v2656, 7
    %v2658 = vsub.s32 %v1443, %v2657
    %v2659 = vrot.slane %v1005, %v2658
    %v2660 = vsel %vm1448, %v2659, %v2655
    %v2661 = vlaneseq
    %v2662 = vshrl.u32 %v2661, 7
    %v2663 = vsub.s32 %v1450, %v2662
    %v2664 = vrot.slane %v1008, %v2663
    %v2665 = vsel %vm1455, %v2664, %v2660
    %v2666 = vlaneseq
    %v2667 = vshrl.u32 %v2666, 7
    %v2668 = vsub.s32 %v1457, %v2667
    %v2669 = vrot.slane %v1011, %v2668
    %v2670 = vsel %vm1462, %v2669, %v2665
    %v2671 = vlaneseq
    %v2672 = vshrl.u32 %v2671, 7
    %v2673 = vsub.s32 %v1464, %v2672
    %v2674 = vrot.slane %v1014, %v2673
    %v2675 = vsel %vm1469, %v2674, %v2670
    %v2676 = vlaneseq
    %v2677 = vshrl.u32 %v2676, 7
    %v2678 = vsub.s32 %v1471, %v2677
    %v2679 = vrot.slane %v1017, %v2678
    %v2680 = vsel %vm1476, %v2679, %v2675
    %v2681 = vlaneseq
    %v2682 = vshrl.u32 %v2681, 7
    %v2683 = vsub.s32 %v1478, %v2682
    %v2684 = vrot.slane %v1020, %v2683
    %v2685 = vsel %vm1483, %v2684, %v2680
    %v2686 = vlaneseq
    %v2687 = vshrl.u32 %v2686, 7
    %v2688 = vsub.s32 %v1485, %v2687
    %v2689 = vrot.slane %v1023, %v2688
    %v2690 = vsel %vm1490, %v2689, %v2685
    %v2691 = vlaneseq
    %v2692 = vshrl.u32 %v2691, 7
    %v2693 = vsub.s32 %v1492, %v2692
    %v2694 = vrot.slane %v1026, %v2693
    %v2695 = vsel %vm1497, %v2694, %v2690
    %v2696 = vlaneseq
    %v2697 = vshrl.u32 %v2696, 7
    %v2698 = vsub.s32 %v1499, %v2697
    %v2699 = vrot.slane %v1029, %v2698
    %v2700 = vsel %vm1504, %v2699, %v2695
    %v2701 = vlaneseq
    %v2702 = vshrl.u32 %v2701, 7
    %v2703 = vsub.s32 %v1506, %v2702
    %v2704 = vrot.slane %v1032, %v2703
    %v2705 = vsel %vm1511, %v2704, %v2700
    %v2706 = vlaneseq
    %v2707 = vshrl.u32 %v2706, 7
    %v2708 = vsub.s32 %v1513, %v2707
    %v2709 = vrot.slane %v1035, %v2708
    %v2710 = vsel %vm1518, %v2709, %v2705
    %v2711 = vlaneseq
    %v2712 = vshrl.u32 %v2711, 7
    %v2713 = vsub.s32 %v1520, %v2712
    %v2714 = vrot.slane %v1038, %v2713
    %v2715 = vsel %vm1525, %v2714, %v2710
    %v2716 = vlaneseq
    %v2717 = vshrl.u32 %v2716, 7
    %v2718 = vsub.s32 %v1527, %v2717
    %v2719 = vrot.slane %v1041, %v2718
    %v2720 = vsel %vm1532, %v2719, %v2715
    %v2721 = vlaneseq
    %v2722 = vshrl.u32 %v2721, 7
    %v2723 = vsub.s32 %v1534, %v2722
    %v2724 = vrot.slane %v1044, %v2723
    %v2725 = vsel %vm1539, %v2724, %v2720
    %vm2726 = vcmask 1041409
    %v2727 = vsel %vm2726, %v2172, %v1540
    %v2728 = vsel %vm2726, %v2251, %v1619
    %v2729 = vsel %vm2726, %v2330, %v1698
    %v2730 = vsel %vm2726, %v2409, %v1777
    %v2731 = vsel %vm2726, %v2488, %v1856
    %v2732 = vsel %vm2726, %v2567, %v1935
    %v2733 = vsel %vm2726, %v2646, %v2014
    %v2734 = vsel %vm2726, %v2725, %v2093
    %2743 = vmatprep.subr.mxu0 0.0
    %2744 = vmatpush1.msra.mxu0 %v1046
    %2745 = vmatprep.subr.mxu0 0.0
    %2746 = vmatpush1.msra.mxu0 %v1047
    %2747 = vmatprep.subr.mxu0 0.0
    %2748 = vmatpush1.msra.mxu0 %v1048
    %2749 = vmatprep.subr.mxu0 0.0
    %2750 = vmatpush1.msra.mxu0 %v1049
    %2751 = vmatprep.subr.mxu0 0.0
    %2752 = vmatpush1.msra.mxu0 %v1050
    %2753 = vmatprep.subr.mxu0 0.0
    %2754 = vmatpush1.msra.mxu0 %v1051
    %2755 = vmatprep.subr.mxu0 0.0
    %2756 = vmatpush1.msra.mxu0 %v1052
    %2757 = vmatprep.subr.mxu0 0.0
    %2758 = vmatpush1.msra.mxu0 %v1053
    %2759 = vmatprep.subr.mxu0 0.0
    %2760 = vmatpush1.msra.mxu0 %v1054
    %2761 = vmatprep.subr.mxu0 0.0
    %2762 = vmatpush1.msra.mxu0 %v1055
    %2763 = vmatprep.subr.mxu0 0.0
    %2764 = vmatpush1.msra.mxu0 %v1056
    %2765 = vmatprep.subr.mxu0 0.0
    %2766 = vmatpush1.msra.mxu0 %v1057
    %2767 = vmatprep.subr.mxu0 0.0
    %2768 = vmatpush1.msra.mxu0 %v1058
    %2769 = vmatprep.subr.mxu0 0.0
    %2770 = vmatpush1.msra.mxu0 %v1059
    %2771 = vmatprep.subr.mxu0 0.0
    %2772 = vmatpush1.msra.mxu0 %v1060
    %2773 = vmatprep.subr.mxu0 0.0
    %2774 = vmatpush1.msra.mxu0 %v1061
    %2775 = vmatprep.subr.mxu0 0.0
    %2776 = vmatpush1.msra.mxu0 %v1062
    %2777 = vmatprep.subr.mxu0 0.0
    %2778 = vmatpush1.msra.mxu0 %v1063
    %2779 = vmatprep.subr.mxu0 0.0
    %2780 = vmatpush1.msra.mxu0 %v1064
    %2781 = vmatprep.subr.mxu0 0.0
    %2782 = vmatpush1.msra.mxu0 %v1065
    %2783 = vmatprep.subr.mxu0 0.0
    %2784 = vmatpush1.msra.mxu0 %v1066
    %2785 = vmatprep.subr.mxu0 0.0
    %2786 = vmatpush1.msra.mxu0 %v1067
    %2787 = vmatprep.subr.mxu0 0.0
    %2788 = vmatpush1.msra.mxu0 %v1068
    %2789 = vmatprep.subr.mxu0 0.0
    %2790 = vmatpush1.msra.mxu0 %v1069
    %2791 = vmatprep.subr.mxu0 0.0
    %2792 = vmatpush1.msra.mxu0 %v1070
    %2793 = vmatprep.subr.mxu0 0.0
    %2794 = vmatpush1.msra.mxu0 %v1071
    %2795 = vmatprep.subr.mxu0 0.0
    %2796 = vmatpush1.msra.mxu0 %v1072
    %2797 = vmatprep.subr.mxu0 0.0
    %2798 = vmatpush1.msra.mxu0 %v1073
    %2799 = vmatprep.subr.mxu0 0.0
    %2800 = vmatpush1.msra.mxu0 %v1074
    %2801 = vmatprep.subr.mxu0 0.0
    %2802 = vmatpush1.msra.mxu0 %v1075
    %2803 = vmatprep.subr.mxu0 0.0
    %2804 = vmatpush1.msra.mxu0 %v1076
    %2805 = vmatprep.subr.mxu0 0.0
    %2806 = vmatpush1.msra.mxu0 %v1077
    %2807 = vmatprep.mubr.f32.mxu0 %v2728
    %2808 = vmatmul.mubr.f32.gmra.mrb[0].mxu0 %v2727
    %v2809 = vpop.f32.mrb[0].mxu0
    %v2810 = vadd.f32 0.0, %v2809
    %v2811 = vpop.f32.mrb[0].mxu0
    %2812 = vdwg.mxu0
    %2813 = vmatprep.subr.mxu0 0.0
    %2814 = vmatpush1.msra.mxu0 %v1078
    %2815 = vmatprep.subr.mxu0 0.0
    %2816 = vmatpush1.msra.mxu0 %v1079
    %2817 = vmatprep.subr.mxu0 0.0
    %2818 = vmatpush1.msra.mxu0 %v1080
    %2819 = vmatprep.subr.mxu0 0.0
    %2820 = vmatpush1.msra.mxu0 %v1081
    %2821 = vmatprep.subr.mxu0 0.0
    %2822 = vmatpush1.msra.mxu0 %v1082
    %2823 = vmatprep.subr.mxu0 0.0
    %2824 = vmatpush1.msra.mxu0 %v1083
    %2825 = vmatprep.subr.mxu0 0.0
    %2826 = vmatpush1.msra.mxu0 %v1084
    %2827 = vmatprep.subr.mxu0 0.0
    %2828 = vmatpush1.msra.mxu0 %v1085
    %2829 = vmatprep.subr.mxu0 0.0
    %2830 = vmatpush1.msra.mxu0 %v1086
    %2831 = vmatprep.subr.mxu0 0.0
    %2832 = vmatpush1.msra.mxu0 %v1087
    %2833 = vmatprep.subr.mxu0 0.0
    %2834 = vmatpush1.msra.mxu0 %v1088
    %2835 = vmatprep.subr.mxu0 0.0
    %2836 = vmatpush1.msra.mxu0 %v1089
    %2837 = vmatprep.subr.mxu0 0.0
    %2838 = vmatpush1.msra.mxu0 %v1090
    %2839 = vmatprep.subr.mxu0 0.0
    %2840 = vmatpush1.msra.mxu0 %v1091
    %2841 = vmatprep.subr.mxu0 0.0
    %2842 = vmatpush1.msra.mxu0 %v1092
    %2843 = vmatprep.subr.mxu0 0.0
    %2844 = vmatpush1.msra.mxu0 %v1093
    %2845 = vmatprep.subr.mxu0 0.0
    %2846 = vmatpush1.msra.mxu0 %v1094
    %2847 = vmatprep.subr.mxu0 0.0
    %2848 = vmatpush1.msra.mxu0 %v1095
    %2849 = vmatprep.subr.mxu0 0.0
    %2850 = vmatpush1.msra.mxu0 %v1096
    %2851 = vmatprep.subr.mxu0 0.0
    %2852 = vmatpush1.msra.mxu0 %v1097
    %2853 = vmatprep.subr.mxu0 0.0
    %2854 = vmatpush1.msra.mxu0 %v1098
    %2855 = vmatprep.subr.mxu0 0.0
    %2856 = vmatpush1.msra.mxu0 %v1099
    %2857 = vmatprep.subr.mxu0 0.0
    %2858 = vmatpush1.msra.mxu0 %v1100
    %2859 = vmatprep.subr.mxu0 0.0
    %2860 = vmatpush1.msra.mxu0 %v1101
    %2861 = vmatprep.subr.mxu0 0.0
    %2862 = vmatpush1.msra.mxu0 %v1102
    %2863 = vmatprep.subr.mxu0 0.0
    %2864 = vmatpush1.msra.mxu0 %v1103
    %2865 = vmatprep.subr.mxu0 0.0
    %2866 = vmatpush1.msra.mxu0 %v1104
    %2867 = vmatprep.subr.mxu0 0.0
    %2868 = vmatpush1.msra.mxu0 %v1105
    %2869 = vmatprep.subr.mxu0 0.0
    %2870 = vmatpush1.msra.mxu0 %v1106
    %2871 = vmatprep.subr.mxu0 0.0
    %2872 = vmatpush1.msra.mxu0 %v1107
    %2873 = vmatprep.subr.mxu0 0.0
    %2874 = vmatpush1.msra.mxu0 %v1108
    %2875 = vmatprep.subr.mxu0 0.0
    %2876 = vmatpush1.msra.mxu0 %v1109
    %2877 = vmatprep.mubr.f32.mxu0 %v2730
    %2878 = vmatmul.mubr.f32.gmra.mrb[0].mxu0 %v2729
    %v2879 = vpop.f32.mrb[0].mxu0
    %v2880 = vadd.f32 %v2810, %v2879
    %v2881 = vpop.f32.mrb[0].mxu0
    %2882 = vdwg.mxu0
    %2883 = vmatprep.subr.mxu0 0.0
    %2884 = vmatpush1.msra.mxu0 %v1110
    %2885 = vmatprep.subr.mxu0 0.0
    %2886 = vmatpush1.msra.mxu0 %v1111
    %2887 = vmatprep.subr.mxu0 0.0
    %2888 = vmatpush1.msra.mxu0 %v1112
    %2889 = vmatprep.subr.mxu0 0.0
    %2890 = vmatpush1.msra.mxu0 %v1113
    %2891 = vmatprep.subr.mxu0 0.0
    %2892 = vmatpush1.msra.mxu0 %v1114
    %2893 = vmatprep.subr.mxu0 0.0
    %2894 = vmatpush1.msra.mxu0 %v1115
    %2895 = vmatprep.subr.mxu0 0.0
    %2896 = vmatpush1.msra.mxu0 %v1116
    %2897 = vmatprep.subr.mxu0 0.0
    %2898 = vmatpush1.msra.mxu0 %v1117
    %2899 = vmatprep.subr.mxu0 0.0
    %2900 = vmatpush1.msra.mxu0 %v1118
    %2901 = vmatprep.subr.mxu0 0.0
    %2902 = vmatpush1.msra.mxu0 %v1119
    %2903 = vmatprep.subr.mxu0 0.0
    %2904 = vmatpush1.msra.mxu0 %v1120
    %2905 = vmatprep.subr.mxu0 0.0
    %2906 = vmatpush1.msra.mxu0 %v1121
    %2907 = vmatprep.subr.mxu0 0.0
    %2908 = vmatpush1.msra.mxu0 %v1122
    %2909 = vmatprep.subr.mxu0 0.0
    %2910 = vmatpush1.msra.mxu0 %v1123
    %2911 = vmatprep.subr.mxu0 0.0
    %2912 = vmatpush1.msra.mxu0 %v1124
    %2913 = vmatprep.subr.mxu0 0.0
    %2914 = vmatpush1.msra.mxu0 %v1125
    %2915 = vmatprep.subr.mxu0 0.0
    %2916 = vmatpush1.msra.mxu0 %v1126
    %2917 = vmatprep.subr.mxu0 0.0
    %2918 = vmatpush1.msra.mxu0 %v1127
    %2919 = vmatprep.subr.mxu0 0.0
    %2920 = vmatpush1.msra.mxu0 %v1128
    %2921 = vmatprep.subr.mxu0 0.0
    %2922 = vmatpush1.msra.mxu0 %v1129
    %2923 = vmatprep.subr.mxu0 0.0
    %2924 = vmatpush1.msra.mxu0 %v1130
    %2925 = vmatprep.subr.mxu0 0.0
    %2926 = vmatpush1.msra.mxu0 %v1131
    %2927 = vmatprep.subr.mxu0 0.0
    %2928 = vmatpush1.msra.mxu0 %v1132
    %2929 = vmatprep.subr.mxu0 0.0
    %2930 = vmatpush1.msra.mxu0 %v1133
    %2931 = vmatprep.subr.mxu0 0.0
    %2932 = vmatpush1.msra.mxu0 %v1134
    %2933 = vmatprep.subr.mxu0 0.0
    %2934 = vmatpush1.msra.mxu0 %v1135
    %2935 = vmatprep.subr.mxu0 0.0
    %2936 = vmatpush1.msra.mxu0 %v1136
    %2937 = vmatprep.subr.mxu0 0.0
    %2938 = vmatpush1.msra.mxu0 %v1137
    %2939 = vmatprep.subr.mxu0 0.0
    %2940 = vmatpush1.msra.mxu0 %v1138
    %2941 = vmatprep.subr.mxu0 0.0
    %2942 = vmatpush1.msra.mxu0 %v1139
    %2943 = vmatprep.subr.mxu0 0.0
    %2944 = vmatpush1.msra.mxu0 %v1140
    %2945 = vmatprep.subr.mxu0 0.0
    %2946 = vmatpush1.msra.mxu0 %v1141
    %2947 = vmatprep.mubr.f32.mxu0 %v2732
    %2948 = vmatmul.mubr.f32.gmra.mrb[0].mxu0 %v2731
    %v2949 = vpop.f32.mrb[0].mxu0
    %v2950 = vadd.f32 %v2880, %v2949
    %v2951 = vpop.f32.mrb[0].mxu0
    %2952 = vdwg.mxu0
    %2953 = vmatprep.subr.mxu0 0.0
    %2954 = vmatpush1.msra.mxu0 %v1142
    %2955 = vmatprep.subr.mxu0 0.0
    %2956 = vmatpush1.msra.mxu0 %v1143
    %2957 = vmatprep.subr.mxu0 0.0
    %2958 = vmatpush1.msra.mxu0 %v1144
    %2959 = vmatprep.subr.mxu0 0.0
    %2960 = vmatpush1.msra.mxu0 %v1145
    %2961 = vmatprep.subr.mxu0 0.0
    %2962 = vmatpush1.msra.mxu0 %v1146
    %2963 = vmatprep.subr.mxu0 0.0
    %2964 = vmatpush1.msra.mxu0 %v1147
    %2965 = vmatprep.subr.mxu0 0.0
    %2966 = vmatpush1.msra.mxu0 %v1148
    %2967 = vmatprep.subr.mxu0 0.0
    %2968 = vmatpush1.msra.mxu0 %v1149
    %2969 = vmatprep.subr.mxu0 0.0
    %2970 = vmatpush1.msra.mxu0 %v1150
    %2971 = vmatprep.subr.mxu0 0.0
    %2972 = vmatpush1.msra.mxu0 %v1151
    %2973 = vmatprep.subr.mxu0 0.0
    %2974 = vmatpush1.msra.mxu0 %v1152
    %2975 = vmatprep.subr.mxu0 0.0
    %2976 = vmatpush1.msra.mxu0 %v1153
    %2977 = vmatprep.subr.mxu0 0.0
    %2978 = vmatpush1.msra.mxu0 %v1154
    %2979 = vmatprep.subr.mxu0 0.0
    %2980 = vmatpush1.msra.mxu0 %v1155
    %2981 = vmatprep.subr.mxu0 0.0
    %2982 = vmatpush1.msra.mxu0 %v1156
    %2983 = vmatprep.subr.mxu0 0.0
    %2984 = vmatpush1.msra.mxu0 %v1157
    %2985 = vmatprep.subr.mxu0 0.0
    %2986 = vmatpush1.msra.mxu0 %v1158
    %2987 = vmatprep.subr.mxu0 0.0
    %2988 = vmatpush1.msra.mxu0 %v1159
    %2989 = vmatprep.subr.mxu0 0.0
    %2990 = vmatpush1.msra.mxu0 %v1160
    %2991 = vmatprep.subr.mxu0 0.0
    %2992 = vmatpush1.msra.mxu0 %v1161
    %2993 = vmatprep.subr.mxu0 0.0
    %2994 = vmatpush1.msra.mxu0 %v1162
    %2995 = vmatprep.subr.mxu0 0.0
    %2996 = vmatpush1.msra.mxu0 %v1163
    %2997 = vmatprep.subr.mxu0 0.0
    %2998 = vmatpush1.msra.mxu0 %v1164
    %2999 = vmatprep.subr.mxu0 0.0
    %3000 = vmatpush1.msra.mxu0 %v1165
    %3001 = vmatprep.subr.mxu0 0.0
    %3002 = vmatpush1.msra.mxu0 %v1166
    %3003 = vmatprep.subr.mxu0 0.0
    %3004 = vmatpush1.msra.mxu0 %v1167
    %3005 = vmatprep.subr.mxu0 0.0
    %3006 = vmatpush1.msra.mxu0 %v1168
    %3007 = vmatprep.subr.mxu0 0.0
    %3008 = vmatpush1.msra.mxu0 %v1169
    %3009 = vmatprep.subr.mxu0 0.0
    %3010 = vmatpush1.msra.mxu0 %v1170
    %3011 = vmatprep.subr.mxu0 0.0
    %3012 = vmatpush1.msra.mxu0 %v1171
    %3013 = vmatprep.subr.mxu0 0.0
    %3014 = vmatpush1.msra.mxu0 %v1172
    %3015 = vmatprep.subr.mxu0 0.0
    %3016 = vmatpush1.msra.mxu0 %v1173
    %3017 = vmatprep.mubr.f32.mxu0 %v2734
    %3018 = vmatmul.mubr.f32.gmra.mrb[0].mxu0 %v2733
    %v3019 = vpop.f32.mrb[0].mxu0
    %v3020 = vadd.f32 %v2950, %v3019
    %v3021 = vpop.f32.mrb[0].mxu0
    %3022 = vdwg.mxu0
    %v3023 = vadd.f32 %v1045, %v3020
    %3024 = vst [vmem:[#allocation2] sm:$0x3] %v3023
    // Predicated region
    $region18: #{tpu_custom_call.1} parent=1 // pred_check
      %p3025 = pneg %p15
    $region19: #{tpu_custom_call.1} parent=1 // pred_check_branch
      %3027 = sbr.rel (%p3025) target = $region21
    $region20: #{tpu_custom_call.1} parent=1 // pred_region
      %v3028 = vld [vmem:[#allocation2] sm:$0x3]
      %v3029 = vmul.f32 %v3028, 0.0625
      %v3030 = vld [vmem:[%s2] sm:$0x1]
      %v3032 = vlaneseq
      %v3033 = vshrl.u32 %v3032, 7
      %v3034 = vsub.s32 0, %v3033
      %v3035 = vrot.slane %v3030, %v3034
      %v3037 = vadd.f32 %v3029, %v3035
      %3038 = vst [vmem:[#allocation3] sm:$0x3] %v3037
    $region21: #{tpu_custom_call.1} parent=1 // pred_fallthru
      _
    // Predicated region
    $region22: #{tpu_custom_call.1} parent=1 // pred_check
      _
    $region23: #{tpu_custom_call.1} parent=1 // pred_check_branch
      %3040 = sbr.rel (0) target = $region25
    $region24: #{tpu_custom_call.1} parent=1 // pred_region
      %s3042 = ssub.s32 32, 32
      %3043 = vsyncadd [#allocation4], %s3042
      %s3045 = sshll.u32 [#allocation3], 4
      %s3046 = int_to_ptr.vmem [resolvable:$true] %s3045
      %3048 = dma.vmem_to_hbm [thread:$0]  %s3046, 32, %s3, [#allocation4]
    $region25: #{tpu_custom_call.1} parent=1 // pred_fallthru
      _
    // Predicated region
    $region26: #{tpu_custom_call.1} parent=1 // pred_check
      _
    $region27: #{tpu_custom_call.1} parent=1 // pred_check_branch
      %3050 = sbr.rel (0) target = $region29
    $region28: #{tpu_custom_call.1} parent=1 // pred_region
      %3051 = dma.done [#allocation4], 32
    $region29: #{tpu_custom_call.1} parent=1 // pred_fallthru
      _
    %3052 = vsyncpa [#allocation4], 1

</llo_original>
